<compile_context>
chip_gen: v7x
topology: tpu7x:2x2x1
jax: 0.10.0
libtpu: 0.0.40
codegen_flags: <defaults>
</compile_context>

<pallas_src>
import jax
import jax.numpy as jnp
from jax.experimental import pallas as pl
from jax.experimental.pallas import tpu as pltpu


def _prt_kernel(x_ref, wi_ref, wh_ref, bi_ref, bh_ref, wf_ref, bf_ref, o_ref):
    """Whole-sequence GRU + fc1 + ReLU in one kernel invocation.

    x_ref : (B, S, D)   input, batch-major (module layout)
    wi_ref: (D, 3H)     input->hidden weights, gates concatenated (r|z|n)
    wh_ref: (H, 3H)     hidden->hidden weights, gates concatenated (r|z|n)
    bi_ref: (1, 3H)     input bias (r|z|n)
    bh_ref: (1, 3H)     hidden bias (r|z|n)
    wf_ref: (H, F)      fc1 weight (in, out)
    bf_ref: (1, F)      fc1 bias
    o_ref : (B, S, F)   output
    """
    B, S, D = x_ref.shape
    H = wh_ref.shape[0]

    # ---- Time-major input (S, B, D): one tiny one-time relayout, off the
    #      serial chain, so every per-step read below is a leading-dim index.
    x_tm = jnp.transpose(x_ref[...].astype(jnp.float32), (1, 0, 2))
    x_2d = x_tm.reshape(S * B, D)

    # ---- Hoisted input->hidden projection (single MXU push for all steps).
    #      Fold bh_r and bh_z in ONCE; bh_n must NOT be folded (it sits inside
    #      r * (h@Wh_n + bh_n)).
    bh = bh_ref[...]                                           # (1, 3H)
    bias_all = bi_ref[...] + jnp.concatenate(
        [bh[:, :2 * H], jnp.zeros((1, H), jnp.float32)], axis=-1)
    gi_all = (jnp.dot(x_2d, wi_ref[...], preferred_element_type=jnp.float32)
              + bias_all)                                      # (S*B, 3H)
    gi_all = gi_all.reshape(S, B, 3 * H)                       # time-major

    wh = wh_ref[...]                                           # (H, 3H)
    bh_n = jnp.broadcast_to(bh[:, 2 * H:], (B, H))             # hoisted broadcast

    # ---- Serial recurrence: only h @ Wh + gate math per step. Static unroll
    #      is fine at S=8 (gives the scheduler the whole dependence chain).
    h = jnp.zeros((B, H), jnp.float32)
    hs = []
    for t in range(S):
        gi = gi_all[t]                                         # (B, 3H), leading-dim read
        gh = jnp.dot(h, wh, preferred_element_type=jnp.float32)  # (B, 3H)
        r = jax.nn.sigmoid(gi[:, :H] + gh[:, :H])
        z = jax.nn.sigmoid(gi[:, H:2 * H] + gh[:, H:2 * H])
        n = jnp.tanh(gi[:, 2 * H:] + r * (gh[:, 2 * H:] + bh_n))
        h = (1.0 - z) * n + z * h
        hs.append(h)

    # ---- Hoisted fc1 + ReLU over all steps at once; no VMEM round trip for
    #      the hidden states, single output store.
    h_all = jnp.stack(hs, axis=0).reshape(S * B, H)            # (S*B, H)
    out = jnp.dot(h_all, wf_ref[...], preferred_element_type=jnp.float32)
    out = jnp.maximum(out + bf_ref[...], 0.0)                  # (S*B, F)
    out = jnp.transpose(out.reshape(S, B, -1), (1, 0, 2))      # (B, S, F), tiny
    o_ref[...] = out.astype(o_ref.dtype)


def prt_layer_forward(x, params):
    """x: (batch, n_nodes, input_dim) -> (batch, n_nodes, fc_dim)."""
    wi, wh, bi, bh, wf, bf = (params["wi"], params["wh"], params["bi"],
                              params["bh"], params["wf"], params["bf"])
    B, S, D = x.shape
    F = wf.shape[1]

    vmem_spec = pl.BlockSpec(memory_space=pltpu.MemorySpace.VMEM)

    # Whole problem is a few KiB -> single invocation, everything VMEM-resident.
    # TODO(synk): for large batch on v7x, add a leading "parallel" grid axis
    # over batch blocks to shard the independent recurrences across both TCs.
    return pl.pallas_call(
        _prt_kernel,
        out_shape=jax.ShapeDtypeStruct((B, S, F), x.dtype),
        in_specs=[vmem_spec] * 7,
        out_specs=vmem_spec,
    )(x, wi, wh, bi, bh, wf, bf)


def make_params(key, input_dim, hidden_dim, fc_dim):
    """Deterministic init (PyTorch-style uniform); gate order (r, z, n),
    concatenated along the output dim.

    Note: the original module re-instantiates nn.GRU / nn.Linear with fresh
    random weights on every forward call; here they are fixed parameters."""
    k1, k2, k3, k4, k5, k6 = jax.random.split(key, 6)
    s = float(hidden_dim) ** -0.5
    wi = jax.random.uniform(k1, (input_dim, 3 * hidden_dim), jnp.float32, -s, s)
    wh = jax.random.uniform(k2, (hidden_dim, 3 * hidden_dim), jnp.float32, -s, s)
    bi = jax.random.uniform(k3, (1, 3 * hidden_dim), jnp.float32, -s, s)
    bh = jax.random.uniform(k4, (1, 3 * hidden_dim), jnp.float32, -s, s)
    wf = jax.random.uniform(k5, (hidden_dim, fc_dim), jnp.float32, -s, s)
    bf = jax.random.uniform(k6, (1, fc_dim), jnp.float32, -s, s)
    return dict(wi=wi, wh=wh, bi=bi, bh=bh, wf=wf, bf=bf)


def prt_layer_reference(x, params):
    """Plain-JAX reference (PyTorch GRU semantics) for correctness checking."""
    wi, wh, bi, bh, wf, bf = (params["wi"], params["wh"], params["bi"],
                              params["bh"], params["wf"], params["bf"])
    B = x.shape[0]
    H = wh.shape[0]
    x_tm = jnp.transpose(x, (1, 0, 2))             # (S, B, D)

    def step(h, xt):
        gi = xt @ wi + bi                          # (B, 3H)
        gh = h @ wh + bh                           # (B, 3H)
        r = jax.nn.sigmoid(gi[:, :H] + gh[:, :H])
        z = jax.nn.sigmoid(gi[:, H:2 * H] + gh[:, H:2 * H])
        n = jnp.tanh(gi[:, 2 * H:] + r * gh[:, 2 * H:])
        h_new = (1.0 - z) * n + z * h
        return h_new, h_new

    h0 = jnp.zeros((B, H), jnp.float32)
    _, hs = jax.lax.scan(step, h0, x_tm)           # (S, B, H)
    out = jnp.maximum(hs @ wf + bf, 0.0)           # (S, B, F)
    return jnp.transpose(out, (1, 0, 2))           # (B, S, F)


if __name__ == "__main__":
    # Shapes consistent with the module's forward: x is (batch, n_nodes, input_dim).
    batch, n_nodes, input_dim = 2, 8, 4
    hidden_dim, fc_dim = 32, 16

    key = jax.random.PRNGKey(0)
    kx, kp = jax.random.split(key)
    x = jax.random.normal(kx, (batch, n_nodes, input_dim), jnp.float32)
    params = make_params(kp, input_dim, hidden_dim, fc_dim)

    out = prt_layer_forward(x, params)
    out = jax.block_until_ready(out)

    ref = prt_layer_reference(x, params)
    assert out.shape == (batch, n_nodes, fc_dim)
    assert jnp.allclose(out, ref, atol=1e-5, rtol=1e-5), "mismatch vs reference"

    print("KERNEL_OK")
</pallas_src>

<mosaic_0001>
module attributes {stable_mosaic.version = 11 : i64} {
  func.func @_prt_kernel(%arg0: memref<2x8x4xf32, #tpu.memory_space<vmem>>, %arg1: memref<4x96xf32, #tpu.memory_space<vmem>>, %arg2: memref<32x96xf32, #tpu.memory_space<vmem>>, %arg3: memref<1x96xf32, #tpu.memory_space<vmem>>, %arg4: memref<1x96xf32, #tpu.memory_space<vmem>>, %arg5: memref<32x16xf32, #tpu.memory_space<vmem>>, %arg6: memref<1x16xf32, #tpu.memory_space<vmem>>, %arg7: memref<2x8x16xf32, #tpu.memory_space<vmem>>) attributes {dimension_semantics = [], scalar_prefetch = 0 : i64, scratch_operands = 0 : i64, tpu.core_type = #tpu.core_type<tc>} {
    %c0 = arith.constant 0 : index
    %c0_0 = arith.constant 0 : index
    %c0_1 = arith.constant 0 : index
    %0 = vector.load %arg0[%c0, %c0_0, %c0_1] : memref<2x8x4xf32, #tpu.memory_space<vmem>>, vector<2x8x4xf32>
    %1 = tpu.transpose %0, [1, 0, 2] : vector<2x8x4xf32> -> vector<8x2x4xf32>
    %2 = vector.shape_cast %1 : vector<8x2x4xf32> to vector<16x4xf32>
    %c0_2 = arith.constant 0 : index
    %c0_3 = arith.constant 0 : index
    %3 = vector.load %arg4[%c0_2, %c0_3] : memref<1x96xf32, #tpu.memory_space<vmem>>, vector<1x96xf32>
    %c0_4 = arith.constant 0 : index
    %c0_5 = arith.constant 0 : index
    %4 = vector.load %arg3[%c0_4, %c0_5] : memref<1x96xf32, #tpu.memory_space<vmem>>, vector<1x96xf32>
    %5 = vector.extract_strided_slice %3 {offsets = [0, 0], sizes = [1, 64], strides = [1, 1]} : vector<1x96xf32> to vector<1x64xf32>
    %cst = arith.constant 0.000000e+00 : f32
    %6 = vector.broadcast %cst : f32 to vector<1x32xf32>
    %7 = tpu.concatenate %5, %6 in 1 : vector<1x64xf32>, vector<1x32xf32> -> vector<1x96xf32>
    %8 = arith.addf %4, %7 : vector<1x96xf32>
    %c0_6 = arith.constant 0 : index
    %c0_7 = arith.constant 0 : index
    %9 = vector.load %arg1[%c0_6, %c0_7] : memref<4x96xf32, #tpu.memory_space<vmem>>, vector<4x96xf32>
    %cst_8 = arith.constant dense<0.000000e+00> : vector<16x96xf32>
    %10 = tpu.matmul %2, %9, %cst_8 {dimension_numbers = #tpu.dot_dimension_numbers<[1], [0], [0], [1], [0, 0, 1, 1], [], []>} : vector<16x4xf32>, vector<4x96xf32>, vector<16x96xf32> -> vector<16x96xf32>
    %11 = vector.broadcast %8 : vector<1x96xf32> to vector<16x96xf32>
    %12 = arith.addf %10, %11 : vector<16x96xf32>
    %13 = vector.shape_cast %12 : vector<16x96xf32> to vector<8x2x96xf32>
    %c0_9 = arith.constant 0 : index
    %c0_10 = arith.constant 0 : index
    %14 = vector.load %arg2[%c0_9, %c0_10] : memref<32x96xf32, #tpu.memory_space<vmem>>, vector<32x96xf32>
    %15 = vector.extract_strided_slice %3 {offsets = [0, 64], sizes = [1, 32], strides = [1, 1]} : vector<1x96xf32> to vector<1x32xf32>
    %16 = vector.shape_cast %15 : vector<1x32xf32> to vector<1x32xf32>
    %17 = vector.broadcast %16 : vector<1x32xf32> to vector<2x32xf32>
    %cst_11 = arith.constant 0.000000e+00 : f32
    %18 = vector.broadcast %cst_11 : f32 to vector<2x32xf32>
    %19 = vector.extract_strided_slice %13 {offsets = [0, 0, 0], sizes = [1, 2, 96], strides = [1, 1, 1]} : vector<8x2x96xf32> to vector<1x2x96xf32>
    %20 = vector.shape_cast %19 : vector<1x2x96xf32> to vector<2x96xf32>
    %cst_12 = arith.constant dense<0.000000e+00> : vector<2x96xf32>
    %21 = tpu.matmul %18, %14, %cst_12 {dimension_numbers = #tpu.dot_dimension_numbers<[1], [0], [0], [1], [0, 0, 1, 1], [], []>} : vector<2x32xf32>, vector<32x96xf32>, vector<2x96xf32> -> vector<2x96xf32>
    %22 = vector.extract_strided_slice %20 {offsets = [0, 0], sizes = [2, 32], strides = [1, 1]} : vector<2x96xf32> to vector<2x32xf32>
    %23 = vector.extract_strided_slice %21 {offsets = [0, 0], sizes = [2, 32], strides = [1, 1]} : vector<2x96xf32> to vector<2x32xf32>
    %24 = arith.addf %22, %23 : vector<2x32xf32>
    %25 = arith.negf %24 : vector<2x32xf32>
    %26 = math.exp %25 : vector<2x32xf32>
    %cst_13 = arith.constant 1.000000e+00 : f32
    %27 = vector.broadcast %cst_13 : f32 to vector<2x32xf32>
    %28 = arith.addf %27, %26 : vector<2x32xf32>
    %29 = arith.divf %27, %28 : vector<2x32xf32>
    %30 = vector.extract_strided_slice %20 {offsets = [0, 32], sizes = [2, 32], strides = [1, 1]} : vector<2x96xf32> to vector<2x32xf32>
    %31 = vector.extract_strided_slice %21 {offsets = [0, 32], sizes = [2, 32], strides = [1, 1]} : vector<2x96xf32> to vector<2x32xf32>
    %32 = arith.addf %30, %31 : vector<2x32xf32>
    %33 = arith.negf %32 : vector<2x32xf32>
    %34 = math.exp %33 : vector<2x32xf32>
    %cst_14 = arith.constant 1.000000e+00 : f32
    %35 = vector.broadcast %cst_14 : f32 to vector<2x32xf32>
    %36 = arith.addf %35, %34 : vector<2x32xf32>
    %37 = arith.divf %35, %36 : vector<2x32xf32>
    %38 = vector.extract_strided_slice %20 {offsets = [0, 64], sizes = [2, 32], strides = [1, 1]} : vector<2x96xf32> to vector<2x32xf32>
    %39 = vector.extract_strided_slice %21 {offsets = [0, 64], sizes = [2, 32], strides = [1, 1]} : vector<2x96xf32> to vector<2x32xf32>
    %40 = arith.addf %39, %17 : vector<2x32xf32>
    %41 = arith.mulf %29, %40 : vector<2x32xf32>
    %42 = arith.addf %38, %41 : vector<2x32xf32>
    %43 = math.tanh %42 : vector<2x32xf32>
    %cst_15 = arith.constant 1.000000e+00 : f32
    %44 = vector.broadcast %cst_15 : f32 to vector<2x32xf32>
    %45 = arith.subf %44, %37 : vector<2x32xf32>
    %46 = arith.mulf %45, %43 : vector<2x32xf32>
    %47 = arith.mulf %37, %18 : vector<2x32xf32>
    %48 = arith.addf %46, %47 : vector<2x32xf32>
    %49 = vector.extract_strided_slice %13 {offsets = [1, 0, 0], sizes = [1, 2, 96], strides = [1, 1, 1]} : vector<8x2x96xf32> to vector<1x2x96xf32>
    %50 = vector.shape_cast %49 : vector<1x2x96xf32> to vector<2x96xf32>
    %cst_16 = arith.constant dense<0.000000e+00> : vector<2x96xf32>
    %51 = tpu.matmul %48, %14, %cst_16 {dimension_numbers = #tpu.dot_dimension_numbers<[1], [0], [0], [1], [0, 0, 1, 1], [], []>} : vector<2x32xf32>, vector<32x96xf32>, vector<2x96xf32> -> vector<2x96xf32>
    %52 = vector.extract_strided_slice %50 {offsets = [0, 0], sizes = [2, 32], strides = [1, 1]} : vector<2x96xf32> to vector<2x32xf32>
    %53 = vector.extract_strided_slice %51 {offsets = [0, 0], sizes = [2, 32], strides = [1, 1]} : vector<2x96xf32> to vector<2x32xf32>
    %54 = arith.addf %52, %53 : vector<2x32xf32>
    %55 = arith.negf %54 : vector<2x32xf32>
    %56 = math.exp %55 : vector<2x32xf32>
    %cst_17 = arith.constant 1.000000e+00 : f32
    %57 = vector.broadcast %cst_17 : f32 to vector<2x32xf32>
    %58 = arith.addf %57, %56 : vector<2x32xf32>
    %59 = arith.divf %57, %58 : vector<2x32xf32>
    %60 = vector.extract_strided_slice %50 {offsets = [0, 32], sizes = [2, 32], strides = [1, 1]} : vector<2x96xf32> to vector<2x32xf32>
    %61 = vector.extract_strided_slice %51 {offsets = [0, 32], sizes = [2, 32], strides = [1, 1]} : vector<2x96xf32> to vector<2x32xf32>
    %62 = arith.addf %60, %61 : vector<2x32xf32>
    %63 = arith.negf %62 : vector<2x32xf32>
    %64 = math.exp %63 : vector<2x32xf32>
    %cst_18 = arith.constant 1.000000e+00 : f32
    %65 = vector.broadcast %cst_18 : f32 to vector<2x32xf32>
    %66 = arith.addf %65, %64 : vector<2x32xf32>
    %67 = arith.divf %65, %66 : vector<2x32xf32>
    %68 = vector.extract_strided_slice %50 {offsets = [0, 64], sizes = [2, 32], strides = [1, 1]} : vector<2x96xf32> to vector<2x32xf32>
    %69 = vector.extract_strided_slice %51 {offsets = [0, 64], sizes = [2, 32], strides = [1, 1]} : vector<2x96xf32> to vector<2x32xf32>
    %70 = arith.addf %69, %17 : vector<2x32xf32>
    %71 = arith.mulf %59, %70 : vector<2x32xf32>
    %72 = arith.addf %68, %71 : vector<2x32xf32>
    %73 = math.tanh %72 : vector<2x32xf32>
    %cst_19 = arith.constant 1.000000e+00 : f32
    %74 = vector.broadcast %cst_19 : f32 to vector<2x32xf32>
    %75 = arith.subf %74, %67 : vector<2x32xf32>
    %76 = arith.mulf %75, %73 : vector<2x32xf32>
    %77 = arith.mulf %67, %48 : vector<2x32xf32>
    %78 = arith.addf %76, %77 : vector<2x32xf32>
    %79 = vector.extract_strided_slice %13 {offsets = [2, 0, 0], sizes = [1, 2, 96], strides = [1, 1, 1]} : vector<8x2x96xf32> to vector<1x2x96xf32>
    %80 = vector.shape_cast %79 : vector<1x2x96xf32> to vector<2x96xf32>
    %cst_20 = arith.constant dense<0.000000e+00> : vector<2x96xf32>
    %81 = tpu.matmul %78, %14, %cst_20 {dimension_numbers = #tpu.dot_dimension_numbers<[1], [0], [0], [1], [0, 0, 1, 1], [], []>} : vector<2x32xf32>, vector<32x96xf32>, vector<2x96xf32> -> vector<2x96xf32>
    %82 = vector.extract_strided_slice %80 {offsets = [0, 0], sizes = [2, 32], strides = [1, 1]} : vector<2x96xf32> to vector<2x32xf32>
    %83 = vector.extract_strided_slice %81 {offsets = [0, 0], sizes = [2, 32], strides = [1, 1]} : vector<2x96xf32> to vector<2x32xf32>
    %84 = arith.addf %82, %83 : vector<2x32xf32>
    %85 = arith.negf %84 : vector<2x32xf32>
    %86 = math.exp %85 : vector<2x32xf32>
    %cst_21 = arith.constant 1.000000e+00 : f32
    %87 = vector.broadcast %cst_21 : f32 to vector<2x32xf32>
    %88 = arith.addf %87, %86 : vector<2x32xf32>
    %89 = arith.divf %87, %88 : vector<2x32xf32>
    %90 = vector.extract_strided_slice %80 {offsets = [0, 32], sizes = [2, 32], strides = [1, 1]} : vector<2x96xf32> to vector<2x32xf32>
    %91 = vector.extract_strided_slice %81 {offsets = [0, 32], sizes = [2, 32], strides = [1, 1]} : vector<2x96xf32> to vector<2x32xf32>
    %92 = arith.addf %90, %91 : vector<2x32xf32>
    %93 = arith.negf %92 : vector<2x32xf32>
    %94 = math.exp %93 : vector<2x32xf32>
    %cst_22 = arith.constant 1.000000e+00 : f32
    %95 = vector.broadcast %cst_22 : f32 to vector<2x32xf32>
    %96 = arith.addf %95, %94 : vector<2x32xf32>
    %97 = arith.divf %95, %96 : vector<2x32xf32>
    %98 = vector.extract_strided_slice %80 {offsets = [0, 64], sizes = [2, 32], strides = [1, 1]} : vector<2x96xf32> to vector<2x32xf32>
    %99 = vector.extract_strided_slice %81 {offsets = [0, 64], sizes = [2, 32], strides = [1, 1]} : vector<2x96xf32> to vector<2x32xf32>
    %100 = arith.addf %99, %17 : vector<2x32xf32>
    %101 = arith.mulf %89, %100 : vector<2x32xf32>
    %102 = arith.addf %98, %101 : vector<2x32xf32>
    %103 = math.tanh %102 : vector<2x32xf32>
    %cst_23 = arith.constant 1.000000e+00 : f32
    %104 = vector.broadcast %cst_23 : f32 to vector<2x32xf32>
    %105 = arith.subf %104, %97 : vector<2x32xf32>
    %106 = arith.mulf %105, %103 : vector<2x32xf32>
    %107 = arith.mulf %97, %78 : vector<2x32xf32>
    %108 = arith.addf %106, %107 : vector<2x32xf32>
    %109 = vector.extract_strided_slice %13 {offsets = [3, 0, 0], sizes = [1, 2, 96], strides = [1, 1, 1]} : vector<8x2x96xf32> to vector<1x2x96xf32>
    %110 = vector.shape_cast %109 : vector<1x2x96xf32> to vector<2x96xf32>
    %cst_24 = arith.constant dense<0.000000e+00> : vector<2x96xf32>
    %111 = tpu.matmul %108, %14, %cst_24 {dimension_numbers = #tpu.dot_dimension_numbers<[1], [0], [0], [1], [0, 0, 1, 1], [], []>} : vector<2x32xf32>, vector<32x96xf32>, vector<2x96xf32> -> vector<2x96xf32>
    %112 = vector.extract_strided_slice %110 {offsets = [0, 0], sizes = [2, 32], strides = [1, 1]} : vector<2x96xf32> to vector<2x32xf32>
    %113 = vector.extract_strided_slice %111 {offsets = [0, 0], sizes = [2, 32], strides = [1, 1]} : vector<2x96xf32> to vector<2x32xf32>
    %114 = arith.addf %112, %113 : vector<2x32xf32>
    %115 = arith.negf %114 : vector<2x32xf32>
    %116 = math.exp %115 : vector<2x32xf32>
    %cst_25 = arith.constant 1.000000e+00 : f32
    %117 = vector.broadcast %cst_25 : f32 to vector<2x32xf32>
    %118 = arith.addf %117, %116 : vector<2x32xf32>
    %119 = arith.divf %117, %118 : vector<2x32xf32>
    %120 = vector.extract_strided_slice %110 {offsets = [0, 32], sizes = [2, 32], strides = [1, 1]} : vector<2x96xf32> to vector<2x32xf32>
    %121 = vector.extract_strided_slice %111 {offsets = [0, 32], sizes = [2, 32], strides = [1, 1]} : vector<2x96xf32> to vector<2x32xf32>
    %122 = arith.addf %120, %121 : vector<2x32xf32>
    %123 = arith.negf %122 : vector<2x32xf32>
    %124 = math.exp %123 : vector<2x32xf32>
    %cst_26 = arith.constant 1.000000e+00 : f32
    %125 = vector.broadcast %cst_26 : f32 to vector<2x32xf32>
    %126 = arith.addf %125, %124 : vector<2x32xf32>
    %127 = arith.divf %125, %126 : vector<2x32xf32>
    %128 = vector.extract_strided_slice %110 {offsets = [0, 64], sizes = [2, 32], strides = [1, 1]} : vector<2x96xf32> to vector<2x32xf32>
    %129 = vector.extract_strided_slice %111 {offsets = [0, 64], sizes = [2, 32], strides = [1, 1]} : vector<2x96xf32> to vector<2x32xf32>
    %130 = arith.addf %129, %17 : vector<2x32xf32>
    %131 = arith.mulf %119, %130 : vector<2x32xf32>
    %132 = arith.addf %128, %131 : vector<2x32xf32>
    %133 = math.tanh %132 : vector<2x32xf32>
    %cst_27 = arith.constant 1.000000e+00 : f32
    %134 = vector.broadcast %cst_27 : f32 to vector<2x32xf32>
    %135 = arith.subf %134, %127 : vector<2x32xf32>
    %136 = arith.mulf %135, %133 : vector<2x32xf32>
    %137 = arith.mulf %127, %108 : vector<2x32xf32>
    %138 = arith.addf %136, %137 : vector<2x32xf32>
    %139 = vector.extract_strided_slice %13 {offsets = [4, 0, 0], sizes = [1, 2, 96], strides = [1, 1, 1]} : vector<8x2x96xf32> to vector<1x2x96xf32>
    %140 = vector.shape_cast %139 : vector<1x2x96xf32> to vector<2x96xf32>
    %cst_28 = arith.constant dense<0.000000e+00> : vector<2x96xf32>
    %141 = tpu.matmul %138, %14, %cst_28 {dimension_numbers = #tpu.dot_dimension_numbers<[1], [0], [0], [1], [0, 0, 1, 1], [], []>} : vector<2x32xf32>, vector<32x96xf32>, vector<2x96xf32> -> vector<2x96xf32>
    %142 = vector.extract_strided_slice %140 {offsets = [0, 0], sizes = [2, 32], strides = [1, 1]} : vector<2x96xf32> to vector<2x32xf32>
    %143 = vector.extract_strided_slice %141 {offsets = [0, 0], sizes = [2, 32], strides = [1, 1]} : vector<2x96xf32> to vector<2x32xf32>
    %144 = arith.addf %142, %143 : vector<2x32xf32>
    %145 = arith.negf %144 : vector<2x32xf32>
    %146 = math.exp %145 : vector<2x32xf32>
    %cst_29 = arith.constant 1.000000e+00 : f32
    %147 = vector.broadcast %cst_29 : f32 to vector<2x32xf32>
    %148 = arith.addf %147, %146 : vector<2x32xf32>
    %149 = arith.divf %147, %148 : vector<2x32xf32>
    %150 = vector.extract_strided_slice %140 {offsets = [0, 32], sizes = [2, 32], strides = [1, 1]} : vector<2x96xf32> to vector<2x32xf32>
    %151 = vector.extract_strided_slice %141 {offsets = [0, 32], sizes = [2, 32], strides = [1, 1]} : vector<2x96xf32> to vector<2x32xf32>
    %152 = arith.addf %150, %151 : vector<2x32xf32>
    %153 = arith.negf %152 : vector<2x32xf32>
    %154 = math.exp %153 : vector<2x32xf32>
    %cst_30 = arith.constant 1.000000e+00 : f32
    %155 = vector.broadcast %cst_30 : f32 to vector<2x32xf32>
    %156 = arith.addf %155, %154 : vector<2x32xf32>
    %157 = arith.divf %155, %156 : vector<2x32xf32>
    %158 = vector.extract_strided_slice %140 {offsets = [0, 64], sizes = [2, 32], strides = [1, 1]} : vector<2x96xf32> to vector<2x32xf32>
    %159 = vector.extract_strided_slice %141 {offsets = [0, 64], sizes = [2, 32], strides = [1, 1]} : vector<2x96xf32> to vector<2x32xf32>
    %160 = arith.addf %159, %17 : vector<2x32xf32>
    %161 = arith.mulf %149, %160 : vector<2x32xf32>
    %162 = arith.addf %158, %161 : vector<2x32xf32>
    %163 = math.tanh %162 : vector<2x32xf32>
    %cst_31 = arith.constant 1.000000e+00 : f32
    %164 = vector.broadcast %cst_31 : f32 to vector<2x32xf32>
    %165 = arith.subf %164, %157 : vector<2x32xf32>
    %166 = arith.mulf %165, %163 : vector<2x32xf32>
    %167 = arith.mulf %157, %138 : vector<2x32xf32>
    %168 = arith.addf %166, %167 : vector<2x32xf32>
    %169 = vector.extract_strided_slice %13 {offsets = [5, 0, 0], sizes = [1, 2, 96], strides = [1, 1, 1]} : vector<8x2x96xf32> to vector<1x2x96xf32>
    %170 = vector.shape_cast %169 : vector<1x2x96xf32> to vector<2x96xf32>
    %cst_32 = arith.constant dense<0.000000e+00> : vector<2x96xf32>
    %171 = tpu.matmul %168, %14, %cst_32 {dimension_numbers = #tpu.dot_dimension_numbers<[1], [0], [0], [1], [0, 0, 1, 1], [], []>} : vector<2x32xf32>, vector<32x96xf32>, vector<2x96xf32> -> vector<2x96xf32>
    %172 = vector.extract_strided_slice %170 {offsets = [0, 0], sizes = [2, 32], strides = [1, 1]} : vector<2x96xf32> to vector<2x32xf32>
    %173 = vector.extract_strided_slice %171 {offsets = [0, 0], sizes = [2, 32], strides = [1, 1]} : vector<2x96xf32> to vector<2x32xf32>
    %174 = arith.addf %172, %173 : vector<2x32xf32>
    %175 = arith.negf %174 : vector<2x32xf32>
    %176 = math.exp %175 : vector<2x32xf32>
    %cst_33 = arith.constant 1.000000e+00 : f32
    %177 = vector.broadcast %cst_33 : f32 to vector<2x32xf32>
    %178 = arith.addf %177, %176 : vector<2x32xf32>
    %179 = arith.divf %177, %178 : vector<2x32xf32>
    %180 = vector.extract_strided_slice %170 {offsets = [0, 32], sizes = [2, 32], strides = [1, 1]} : vector<2x96xf32> to vector<2x32xf32>
    %181 = vector.extract_strided_slice %171 {offsets = [0, 32], sizes = [2, 32], strides = [1, 1]} : vector<2x96xf32> to vector<2x32xf32>
    %182 = arith.addf %180, %181 : vector<2x32xf32>
    %183 = arith.negf %182 : vector<2x32xf32>
    %184 = math.exp %183 : vector<2x32xf32>
    %cst_34 = arith.constant 1.000000e+00 : f32
    %185 = vector.broadcast %cst_34 : f32 to vector<2x32xf32>
    %186 = arith.addf %185, %184 : vector<2x32xf32>
    %187 = arith.divf %185, %186 : vector<2x32xf32>
    %188 = vector.extract_strided_slice %170 {offsets = [0, 64], sizes = [2, 32], strides = [1, 1]} : vector<2x96xf32> to vector<2x32xf32>
    %189 = vector.extract_strided_slice %171 {offsets = [0, 64], sizes = [2, 32], strides = [1, 1]} : vector<2x96xf32> to vector<2x32xf32>
    %190 = arith.addf %189, %17 : vector<2x32xf32>
    %191 = arith.mulf %179, %190 : vector<2x32xf32>
    %192 = arith.addf %188, %191 : vector<2x32xf32>
    %193 = math.tanh %192 : vector<2x32xf32>
    %cst_35 = arith.constant 1.000000e+00 : f32
    %194 = vector.broadcast %cst_35 : f32 to vector<2x32xf32>
    %195 = arith.subf %194, %187 : vector<2x32xf32>
    %196 = arith.mulf %195, %193 : vector<2x32xf32>
    %197 = arith.mulf %187, %168 : vector<2x32xf32>
    %198 = arith.addf %196, %197 : vector<2x32xf32>
    %199 = vector.extract_strided_slice %13 {offsets = [6, 0, 0], sizes = [1, 2, 96], strides = [1, 1, 1]} : vector<8x2x96xf32> to vector<1x2x96xf32>
    %200 = vector.shape_cast %199 : vector<1x2x96xf32> to vector<2x96xf32>
    %cst_36 = arith.constant dense<0.000000e+00> : vector<2x96xf32>
    %201 = tpu.matmul %198, %14, %cst_36 {dimension_numbers = #tpu.dot_dimension_numbers<[1], [0], [0], [1], [0, 0, 1, 1], [], []>} : vector<2x32xf32>, vector<32x96xf32>, vector<2x96xf32> -> vector<2x96xf32>
    %202 = vector.extract_strided_slice %200 {offsets = [0, 0], sizes = [2, 32], strides = [1, 1]} : vector<2x96xf32> to vector<2x32xf32>
    %203 = vector.extract_strided_slice %201 {offsets = [0, 0], sizes = [2, 32], strides = [1, 1]} : vector<2x96xf32> to vector<2x32xf32>
    %204 = arith.addf %202, %203 : vector<2x32xf32>
    %205 = arith.negf %204 : vector<2x32xf32>
    %206 = math.exp %205 : vector<2x32xf32>
    %cst_37 = arith.constant 1.000000e+00 : f32
    %207 = vector.broadcast %cst_37 : f32 to vector<2x32xf32>
    %208 = arith.addf %207, %206 : vector<2x32xf32>
    %209 = arith.divf %207, %208 : vector<2x32xf32>
    %210 = vector.extract_strided_slice %200 {offsets = [0, 32], sizes = [2, 32], strides = [1, 1]} : vector<2x96xf32> to vector<2x32xf32>
    %211 = vector.extract_strided_slice %201 {offsets = [0, 32], sizes = [2, 32], strides = [1, 1]} : vector<2x96xf32> to vector<2x32xf32>
    %212 = arith.addf %210, %211 : vector<2x32xf32>
    %213 = arith.negf %212 : vector<2x32xf32>
    %214 = math.exp %213 : vector<2x32xf32>
    %cst_38 = arith.constant 1.000000e+00 : f32
    %215 = vector.broadcast %cst_38 : f32 to vector<2x32xf32>
    %216 = arith.addf %215, %214 : vector<2x32xf32>
    %217 = arith.divf %215, %216 : vector<2x32xf32>
    %218 = vector.extract_strided_slice %200 {offsets = [0, 64], sizes = [2, 32], strides = [1, 1]} : vector<2x96xf32> to vector<2x32xf32>
    %219 = vector.extract_strided_slice %201 {offsets = [0, 64], sizes = [2, 32], strides = [1, 1]} : vector<2x96xf32> to vector<2x32xf32>
    %220 = arith.addf %219, %17 : vector<2x32xf32>
    %221 = arith.mulf %209, %220 : vector<2x32xf32>
    %222 = arith.addf %218, %221 : vector<2x32xf32>
    %223 = math.tanh %222 : vector<2x32xf32>
    %cst_39 = arith.constant 1.000000e+00 : f32
    %224 = vector.broadcast %cst_39 : f32 to vector<2x32xf32>
    %225 = arith.subf %224, %217 : vector<2x32xf32>
    %226 = arith.mulf %225, %223 : vector<2x32xf32>
    %227 = arith.mulf %217, %198 : vector<2x32xf32>
    %228 = arith.addf %226, %227 : vector<2x32xf32>
    %229 = vector.extract_strided_slice %13 {offsets = [7, 0, 0], sizes = [1, 2, 96], strides = [1, 1, 1]} : vector<8x2x96xf32> to vector<1x2x96xf32>
    %230 = vector.shape_cast %229 : vector<1x2x96xf32> to vector<2x96xf32>
    %cst_40 = arith.constant dense<0.000000e+00> : vector<2x96xf32>
    %231 = tpu.matmul %228, %14, %cst_40 {dimension_numbers = #tpu.dot_dimension_numbers<[1], [0], [0], [1], [0, 0, 1, 1], [], []>} : vector<2x32xf32>, vector<32x96xf32>, vector<2x96xf32> -> vector<2x96xf32>
    %232 = vector.extract_strided_slice %230 {offsets = [0, 0], sizes = [2, 32], strides = [1, 1]} : vector<2x96xf32> to vector<2x32xf32>
    %233 = vector.extract_strided_slice %231 {offsets = [0, 0], sizes = [2, 32], strides = [1, 1]} : vector<2x96xf32> to vector<2x32xf32>
    %234 = arith.addf %232, %233 : vector<2x32xf32>
    %235 = arith.negf %234 : vector<2x32xf32>
    %236 = math.exp %235 : vector<2x32xf32>
    %cst_41 = arith.constant 1.000000e+00 : f32
    %237 = vector.broadcast %cst_41 : f32 to vector<2x32xf32>
    %238 = arith.addf %237, %236 : vector<2x32xf32>
    %239 = arith.divf %237, %238 : vector<2x32xf32>
    %240 = vector.extract_strided_slice %230 {offsets = [0, 32], sizes = [2, 32], strides = [1, 1]} : vector<2x96xf32> to vector<2x32xf32>
    %241 = vector.extract_strided_slice %231 {offsets = [0, 32], sizes = [2, 32], strides = [1, 1]} : vector<2x96xf32> to vector<2x32xf32>
    %242 = arith.addf %240, %241 : vector<2x32xf32>
    %243 = arith.negf %242 : vector<2x32xf32>
    %244 = math.exp %243 : vector<2x32xf32>
    %cst_42 = arith.constant 1.000000e+00 : f32
    %245 = vector.broadcast %cst_42 : f32 to vector<2x32xf32>
    %246 = arith.addf %245, %244 : vector<2x32xf32>
    %247 = arith.divf %245, %246 : vector<2x32xf32>
    %248 = vector.extract_strided_slice %230 {offsets = [0, 64], sizes = [2, 32], strides = [1, 1]} : vector<2x96xf32> to vector<2x32xf32>
    %249 = vector.extract_strided_slice %231 {offsets = [0, 64], sizes = [2, 32], strides = [1, 1]} : vector<2x96xf32> to vector<2x32xf32>
    %250 = arith.addf %249, %17 : vector<2x32xf32>
    %251 = arith.mulf %239, %250 : vector<2x32xf32>
    %252 = arith.addf %248, %251 : vector<2x32xf32>
    %253 = math.tanh %252 : vector<2x32xf32>
    %cst_43 = arith.constant 1.000000e+00 : f32
    %254 = vector.broadcast %cst_43 : f32 to vector<2x32xf32>
    %255 = arith.subf %254, %247 : vector<2x32xf32>
    %256 = arith.mulf %255, %253 : vector<2x32xf32>
    %257 = arith.mulf %247, %228 : vector<2x32xf32>
    %258 = arith.addf %256, %257 : vector<2x32xf32>
    %259 = vector.shape_cast %48 : vector<2x32xf32> to vector<1x2x32xf32>
    %260 = vector.shape_cast %78 : vector<2x32xf32> to vector<1x2x32xf32>
    %261 = vector.shape_cast %108 : vector<2x32xf32> to vector<1x2x32xf32>
    %262 = vector.shape_cast %138 : vector<2x32xf32> to vector<1x2x32xf32>
    %263 = vector.shape_cast %168 : vector<2x32xf32> to vector<1x2x32xf32>
    %264 = vector.shape_cast %198 : vector<2x32xf32> to vector<1x2x32xf32>
    %265 = vector.shape_cast %228 : vector<2x32xf32> to vector<1x2x32xf32>
    %266 = vector.shape_cast %258 : vector<2x32xf32> to vector<1x2x32xf32>
    %267 = tpu.concatenate %259, %260, %261, %262, %263, %264, %265, %266 in 0 : vector<1x2x32xf32>, vector<1x2x32xf32>, vector<1x2x32xf32>, vector<1x2x32xf32>, vector<1x2x32xf32>, vector<1x2x32xf32>, vector<1x2x32xf32>, vector<1x2x32xf32> -> vector<8x2x32xf32>
    %268 = vector.shape_cast %267 : vector<8x2x32xf32> to vector<16x32xf32>
    %c0_44 = arith.constant 0 : index
    %c0_45 = arith.constant 0 : index
    %269 = vector.load %arg5[%c0_44, %c0_45] : memref<32x16xf32, #tpu.memory_space<vmem>>, vector<32x16xf32>
    %cst_46 = arith.constant dense<0.000000e+00> : vector<16x16xf32>
    %270 = tpu.matmul %268, %269, %cst_46 {dimension_numbers = #tpu.dot_dimension_numbers<[1], [0], [0], [1], [0, 0, 1, 1], [], []>} : vector<16x32xf32>, vector<32x16xf32>, vector<16x16xf32> -> vector<16x16xf32>
    %c0_47 = arith.constant 0 : index
    %c0_48 = arith.constant 0 : index
    %271 = vector.load %arg6[%c0_47, %c0_48] : memref<1x16xf32, #tpu.memory_space<vmem>>, vector<1x16xf32>
    %272 = vector.broadcast %271 : vector<1x16xf32> to vector<16x16xf32>
    %273 = arith.addf %270, %272 : vector<16x16xf32>
    %cst_49 = arith.constant 0.000000e+00 : f32
    %274 = vector.broadcast %cst_49 : f32 to vector<16x16xf32>
    %275 = arith.maximumf %273, %274 : vector<16x16xf32>
    %276 = vector.shape_cast %275 : vector<16x16xf32> to vector<8x2x16xf32>
    %277 = tpu.transpose %276, [1, 0, 2] : vector<8x2x16xf32> -> vector<2x8x16xf32>
    %c0_50 = arith.constant 0 : index
    %c0_51 = arith.constant 0 : index
    %c0_52 = arith.constant 0 : index
    %278 = vector.load %arg7[%c0_50, %c0_51, %c0_52] : memref<2x8x16xf32, #tpu.memory_space<vmem>>, vector<2x8x16xf32>
    tpu.vector_store %arg7[%c0_50, %c0_51, %c0_52], %277 {strides = array<i32>} : memref<2x8x16xf32, #tpu.memory_space<vmem>>, vector<2x8x16xf32>,
    return
  }
}

</mosaic_0001>

<llo_original>
// kernel: tpu_custom_call.1
$region0: #{tpu_custom_call.1}
  #allocation0 [shape = 'u32[]', space=smem, size = 0x4, offset = 0x4, fixed_abs, tag = 'smem constant byte address 0x4 - core index']
  #allocation1 [shape = 'u32[144,128]{1,0:T(1,128)}', space=vmem, size = 0x12000, scoped, tag = 'internal scratch']
  %s0 = inlined_call_operand.vmem [shape: f32[2,8,4], index: 0, kind: input, shape index: {}]
  %s1 = inlined_call_operand.vmem [shape: f32[4,96], index: 1, kind: input, shape index: {}]
  %s2 = inlined_call_operand.vmem [shape: f32[32,96], index: 2, kind: input, shape index: {}]
  %s3 = inlined_call_operand.vmem [shape: f32[1,96], index: 3, kind: input, shape index: {}]
  %s4 = inlined_call_operand.vmem [shape: f32[1,96], index: 4, kind: input, shape index: {}]
  %s5 = inlined_call_operand.vmem [shape: f32[32,16], index: 5, kind: input, shape index: {}]
  %s6 = inlined_call_operand.vmem [shape: f32[1,16], index: 6, kind: input, shape index: {}]
  %s7 = inlined_call_operand.hbm [shape: f32[2,8,16], index: 7, kind: output, shape index: {}]
  %s8 = sld [smem:[#allocation0]]
  $region38: #{tpu_custom_call.1} parent=0
    _
  %s10 = ssub.s32 1, %s8
  %s11 = scalar_select 0, %s10, %s8
  $region1: #{tpu_custom_call.1} parent=0
    #allocation2 [shape = 'u8[8192]{0}', space=vmem, size = 0x2000, scoped, tag = 'output window, operand 0, single buffered']
    #allocation3 [shape = 's32[1]{0}', space=sflag, size = 0x4, scoped, tag = 'scoped memory for tpu_custom_call.1']
    %12 = vsyncpa [#allocation3], 0
    // Predicated region
    $region2: #{tpu_custom_call.1} parent=1 // pred_check
      _
    $region3: #{tpu_custom_call.1} parent=1 // pred_check_branch
      %14 = sbr.rel (0) target = $region5
    $region4: #{tpu_custom_call.1} parent=1 // pred_region
      _
    $region5: #{tpu_custom_call.1} parent=1 // pred_fallthru
      _
    // Predicated region
    $region6: #{tpu_custom_call.1} parent=1 // pred_check
      _
    $region7: #{tpu_custom_call.1} parent=1 // pred_check_branch
      %16 = sbr.rel (0) target = $region9
    $region8: #{tpu_custom_call.1} parent=1 // pred_region
      _
    $region9: #{tpu_custom_call.1} parent=1 // pred_fallthru
      _
    // Predicated region
    $region10: #{tpu_custom_call.1} parent=1 // pred_check
      _
    $region11: #{tpu_custom_call.1} parent=1 // pred_check_branch
      %18 = sbr.rel (0) target = $region13
    $region12: #{tpu_custom_call.1} parent=1 // pred_region
      _
    $region13: #{tpu_custom_call.1} parent=1 // pred_fallthru
      _
    // Predicated region
    $region14: #{tpu_custom_call.1} parent=1 // pred_check
      _
    $region15: #{tpu_custom_call.1} parent=1 // pred_check_branch
      %20 = sbr.rel (0) target = $region17
    $region16: #{tpu_custom_call.1} parent=1 // pred_region
      _
    $region17: #{tpu_custom_call.1} parent=1 // pred_fallthru
      _
    // Predicated region
    $region18: #{tpu_custom_call.1} parent=1 // pred_check
      _
    $region19: #{tpu_custom_call.1} parent=1 // pred_check_branch
      %22 = sbr.rel (0) target = $region21
    $region20: #{tpu_custom_call.1} parent=1 // pred_region
      _
    $region21: #{tpu_custom_call.1} parent=1 // pred_fallthru
      _
    // Predicated region
    $region22: #{tpu_custom_call.1} parent=1 // pred_check
      _
    $region23: #{tpu_custom_call.1} parent=1 // pred_check_branch
      %24 = sbr.rel (0) target = $region25
    $region24: #{tpu_custom_call.1} parent=1 // pred_region
      _
    $region25: #{tpu_custom_call.1} parent=1 // pred_fallthru
      _
    // Predicated region
    $region26: #{tpu_custom_call.1} parent=1 // pred_check
      _
    $region27: #{tpu_custom_call.1} parent=1 // pred_check_branch
      %26 = sbr.rel (0) target = $region29
    $region28: #{tpu_custom_call.1} parent=1 // pred_region
      _
    $region29: #{tpu_custom_call.1} parent=1 // pred_fallthru
      _
    %v27 = vld [vmem:[%s0] sm:$0xff]
    %v28 = vld [vmem:[%s0 + $0x8] sm:$0xff]
    %v29 = vcombine.high %v27, 0.0
    %v31 = vunpack.c.l.s4 1983009808
    %v32 = vunpack.c.0.s8 %v31
    %v33 = vlaneseq
    %v34 = vshrl.u32 %v33, 7
    %v35 = vsub.s32 %v32, %v34
    %v36 = vrot.slane %v27, %v35
    %v38 = vunpack.c.l.s4 1983009808
    %v39 = vunpack.c.0.s8 %v38
    %v40 = vlaneseq
    %v41 = vshrl.u32 %v40, 7
    %v42 = vsub.s32 %v39, %v41
    %v43 = vrot.slane %v29, %v42
    %v44 = vcombine.high %v28, 0.0
    %v46 = vunpack.c.l.s4 1983009808
    %v47 = vunpack.c.0.s8 %v46
    %v48 = vlaneseq
    %v49 = vshrl.u32 %v48, 7
    %v50 = vsub.s32 %v47, %v49
    %v51 = vrot.slane %v28, %v50
    %v53 = vunpack.c.l.s4 1983009808
    %v54 = vunpack.c.0.s8 %v53
    %v55 = vlaneseq
    %v56 = vshrl.u32 %v55, 7
    %v57 = vsub.s32 %v54, %v56
    %v58 = vrot.slane %v44, %v57
    %v59 = vcombine.low %v36, %v51
    %v60 = vcombine.high %v36, %v51
    %v62 = vunpack.c.l.s4 1934713408
    %v63 = vunpack.c.0.s8 %v62
    %v64 = vlaneseq
    %v65 = vshrl.u32 %v64, 7
    %v66 = vsub.s32 %v63, %v65
    %v67 = vrot.slane %v59, %v66
    %v69 = vunpack.c.l.s4 1934713408
    %v70 = vunpack.c.0.s8 %v69
    %v71 = vlaneseq
    %v72 = vshrl.u32 %v71, 7
    %v73 = vsub.s32 %v70, %v72
    %v74 = vrot.slane %v60, %v73
    %v75 = vcombine.low %v43, %v58
    %v76 = vcombine.high %v43, %v58
    %v78 = vunpack.c.l.s4 1934713408
    %v79 = vunpack.c.0.s8 %v78
    %v80 = vlaneseq
    %v81 = vshrl.u32 %v80, 7
    %v82 = vsub.s32 %v79, %v81
    %v83 = vrot.slane %v75, %v82
    %v85 = vunpack.c.l.s4 1934713408
    %v86 = vunpack.c.0.s8 %v85
    %v87 = vlaneseq
    %v88 = vshrl.u32 %v87, 7
    %v89 = vsub.s32 %v86, %v88
    %v90 = vrot.slane %v76, %v89
    %v91 = vcombine.high %v67, 0.0
    %v92 = vcombine.high %v74, 0.0
    %v93 = vcombine.high %v83, 0.0
    %v94 = vcombine.high %v90, 0.0
    %v95 = vld [vmem:[%s4] sm:$0x1]
    %v96 = vld [vmem:[%s3] sm:$0x1]
    %vm97 = vcmask 523264
    %v98 = vsel %vm97, %v95, 0.0
    %v99 = vadd.f32 %v96, %v98
    %v100 = vld [vmem:[%s1] sm:$0xf]
    %v102 = vlaneseq
    %v103 = vshrl.u32 %v102, 7
    %v104 = vsub.s32 0, %v103
    %v105 = vrot.slane %v99, %v104
    %v115 = vcombine.low %v67, %v91
    %v116 = vcombine.low %v74, %v92
    %v118 = vunpack.c.l.s4 1983009808
    %v119 = vunpack.c.0.s8 %v118
    %v120 = vlaneseq
    %v121 = vshrl.u32 %v120, 7
    %v122 = vsub.s32 %v119, %v121
    %v123 = vrot.slane %v115, %v122
    %v125 = vunpack.c.l.s4 1983009808
    %v126 = vunpack.c.0.s8 %v125
    %v127 = vlaneseq
    %v128 = vshrl.u32 %v127, 7
    %v129 = vsub.s32 %v126, %v128
    %v130 = vrot.slane %v116, %v129
    %v131 = vcombine.low %v123, %v130
    %v132 = vcombine.low %v83, %v93
    %v133 = vcombine.low %v90, %v94
    %v135 = vunpack.c.l.s4 1983009808
    %v136 = vunpack.c.0.s8 %v135
    %v137 = vlaneseq
    %v138 = vshrl.u32 %v137, 7
    %v139 = vsub.s32 %v136, %v138
    %v140 = vrot.slane %v132, %v139
    %v142 = vunpack.c.l.s4 1983009808
    %v143 = vunpack.c.0.s8 %v142
    %v144 = vlaneseq
    %v145 = vshrl.u32 %v144, 7
    %v146 = vsub.s32 %v143, %v145
    %v147 = vrot.slane %v133, %v146
    %v148 = vcombine.low %v140, %v147
    %vm149 = vcmask 31744
    %v150 = vsel %vm149, %v131, 0
    %v152 = vsel %vm149, %v148, 0
    %vm154 = vcmask 1043456
    %v156 = vsel %vm154, %v100, 0
    %158 = vmatprep.subr.mxu0 0.0
    %159 = vmatpush1.msra.mxu0 %v156
    %160 = vmatprep.subr.mxu0 0.0
    %161 = vmatpush1.msra.mxu0 0.0
    %162 = vmatprep.subr.mxu0 0.0
    %163 = vmatpush1.msra.mxu0 0.0
    %164 = vmatprep.subr.mxu0 0.0
    %165 = vmatpush1.msra.mxu0 0.0
    %166 = vmatprep.subr.mxu0 0.0
    %167 = vmatpush1.msra.mxu0 0.0
    %168 = vmatprep.subr.mxu0 0.0
    %169 = vmatpush1.msra.mxu0 0.0
    %170 = vmatprep.subr.mxu0 0.0
    %171 = vmatpush1.msra.mxu0 0.0
    %172 = vmatprep.subr.mxu0 0.0
    %173 = vmatpush1.msra.mxu0 0.0
    %174 = vmatprep.subr.mxu0 0.0
    %175 = vmatpush1.msra.mxu0 0.0
    %176 = vmatprep.subr.mxu0 0.0
    %177 = vmatpush1.msra.mxu0 0.0
    %178 = vmatprep.subr.mxu0 0.0
    %179 = vmatpush1.msra.mxu0 0.0
    %180 = vmatprep.subr.mxu0 0.0
    %181 = vmatpush1.msra.mxu0 0.0
    %182 = vmatprep.subr.mxu0 0.0
    %183 = vmatpush1.msra.mxu0 0.0
    %184 = vmatprep.subr.mxu0 0.0
    %185 = vmatpush1.msra.mxu0 0.0
    %186 = vmatprep.subr.mxu0 0.0
    %187 = vmatpush1.msra.mxu0 0.0
    %188 = vmatprep.subr.mxu0 0.0
    %189 = vmatpush1.msra.mxu0 0.0
    %190 = vmatprep.subr.mxu0 0.0
    %191 = vmatpush1.msra.mxu0 0.0
    %192 = vmatprep.subr.mxu0 0.0
    %193 = vmatpush1.msra.mxu0 0.0
    %194 = vmatprep.subr.mxu0 0.0
    %195 = vmatpush1.msra.mxu0 0.0
    %196 = vmatprep.subr.mxu0 0.0
    %197 = vmatpush1.msra.mxu0 0.0
    %198 = vmatprep.subr.mxu0 0.0
    %199 = vmatpush1.msra.mxu0 0.0
    %200 = vmatprep.subr.mxu0 0.0
    %201 = vmatpush1.msra.mxu0 0.0
    %202 = vmatprep.subr.mxu0 0.0
    %203 = vmatpush1.msra.mxu0 0.0
    %204 = vmatprep.subr.mxu0 0.0
    %205 = vmatpush1.msra.mxu0 0.0
    %206 = vmatprep.subr.mxu0 0.0
    %207 = vmatpush1.msra.mxu0 0.0
    %208 = vmatprep.subr.mxu0 0.0
    %209 = vmatpush1.msra.mxu0 0.0
    %210 = vmatprep.subr.mxu0 0.0
    %211 = vmatpush1.msra.mxu0 0.0
    %212 = vmatprep.subr.mxu0 0.0
    %213 = vmatpush1.msra.mxu0 0.0
    %214 = vmatprep.subr.mxu0 0.0
    %215 = vmatpush1.msra.mxu0 0.0
    %216 = vmatprep.subr.mxu0 0.0
    %217 = vmatpush1.msra.mxu0 0.0
    %218 = vmatprep.subr.mxu0 0.0
    %219 = vmatpush1.msra.mxu0 0.0
    %220 = vmatprep.subr.mxu0 0.0
    %221 = vmatpush1.msra.mxu0 0.0
    %222 = vmatprep.mubr.f32.mxu0 0.0
    %223 = vmatmul.mubr.f32.gmra.mrb[0].mxu0 %v150
    %v224 = vpop.f32.mrb[0].mxu0
    %v225 = vadd.f32 %v105, %v224
    %v226 = vpop.f32.mrb[0].mxu0
    %227 = vmatprep.mubr.f32.mxu0 0.0
    %228 = vmatmul.mubr.f32.gmra.mrb[0].mxu0 %v152
    %v229 = vpop.f32.mrb[0].mxu0
    %v230 = vadd.f32 %v105, %v229
    %v231 = vpop.f32.mrb[0].mxu0
    %232 = vdwg.mxu0
    %v235 = vcombine.high %v225, %v225
    %v237 = vunpack.c.l.s4 1983009808
    %v238 = vunpack.c.0.s8 %v237
    %v239 = vlaneseq
    %v240 = vshrl.u32 %v239, 7
    %v241 = vsub.s32 %v238, %v240
    %v242 = vrot.slane %v225, %v241
    %v244 = vunpack.c.l.s4 1983009808
    %v245 = vunpack.c.0.s8 %v244
    %v246 = vlaneseq
    %v247 = vshrl.u32 %v246, 7
    %v248 = vsub.s32 %v245, %v247
    %v249 = vrot.slane %v235, %v248
    %v250 = vcombine.high %v242, %v242
    %v251 = vcombine.high %v249, %v249
    %v252 = vcombine.high %v230, %v230
    %v254 = vunpack.c.l.s4 1983009808
    %v255 = vunpack.c.0.s8 %v254
    %v256 = vlaneseq
    %v257 = vshrl.u32 %v256, 7
    %v258 = vsub.s32 %v255, %v257
    %v259 = vrot.slane %v230, %v258
    %v261 = vunpack.c.l.s4 1983009808
    %v262 = vunpack.c.0.s8 %v261
    %v263 = vlaneseq
    %v264 = vshrl.u32 %v263, 7
    %v265 = vsub.s32 %v262, %v264
    %v266 = vrot.slane %v252, %v265
    %v267 = vcombine.high %v259, %v259
    %v268 = vcombine.high %v266, %v266
    %v277 = vld [vmem:[%s2] sm:$0xff]
    %v278 = vld [vmem:[%s2 + $0x8] sm:$0xff]
    %v279 = vld [vmem:[%s2 + $0x10] sm:$0xff]
    %v280 = vld [vmem:[%s2 + $0x18] sm:$0xff]
    %v282 = vlaneseq
    %v283 = vshrl.u32 %v282, 7
    %v284 = vsub.s32 0, %v283
    %v285 = vrot.slane %v95, %v284
    %vm287 = vcmask 261120
    %v289 = vsel %vm287, 0.0, 0
    %291 = vmatprep.subr.mxu0 0.0
    %292 = vmatpush1.msra.mxu0 %v277
    %293 = vmatprep.subr.mxu0 0.0
    %294 = vmatpush1.msra.mxu0 %v278
    %295 = vmatprep.subr.mxu0 0.0
    %296 = vmatpush1.msra.mxu0 %v279
    %297 = vmatprep.subr.mxu0 0.0
    %298 = vmatpush1.msra.mxu0 %v280
    %299 = vmatprep.subr.mxu0 0.0
    %300 = vmatpush1.msra.mxu0 0.0
    %301 = vmatprep.subr.mxu0 0.0
    %302 = vmatpush1.msra.mxu0 0.0
    %303 = vmatprep.subr.mxu0 0.0
    %304 = vmatpush1.msra.mxu0 0.0
    %305 = vmatprep.subr.mxu0 0.0
    %306 = vmatpush1.msra.mxu0 0.0
    %307 = vmatprep.subr.mxu0 0.0
    %308 = vmatpush1.msra.mxu0 0.0
    %309 = vmatprep.subr.mxu0 0.0
    %310 = vmatpush1.msra.mxu0 0.0
    %311 = vmatprep.subr.mxu0 0.0
    %312 = vmatpush1.msra.mxu0 0.0
    %313 = vmatprep.subr.mxu0 0.0
    %314 = vmatpush1.msra.mxu0 0.0
    %315 = vmatprep.subr.mxu0 0.0
    %316 = vmatpush1.msra.mxu0 0.0
    %317 = vmatprep.subr.mxu0 0.0
    %318 = vmatpush1.msra.mxu0 0.0
    %319 = vmatprep.subr.mxu0 0.0
    %320 = vmatpush1.msra.mxu0 0.0
    %321 = vmatprep.subr.mxu0 0.0
    %322 = vmatpush1.msra.mxu0 0.0
    %323 = vmatprep.subr.mxu0 0.0
    %324 = vmatpush1.msra.mxu0 0.0
    %325 = vmatprep.subr.mxu0 0.0
    %326 = vmatpush1.msra.mxu0 0.0
    %327 = vmatprep.subr.mxu0 0.0
    %328 = vmatpush1.msra.mxu0 0.0
    %329 = vmatprep.subr.mxu0 0.0
    %330 = vmatpush1.msra.mxu0 0.0
    %331 = vmatprep.subr.mxu0 0.0
    %332 = vmatpush1.msra.mxu0 0.0
    %333 = vmatprep.subr.mxu0 0.0
    %334 = vmatpush1.msra.mxu0 0.0
    %335 = vmatprep.subr.mxu0 0.0
    %336 = vmatpush1.msra.mxu0 0.0
    %337 = vmatprep.subr.mxu0 0.0
    %338 = vmatpush1.msra.mxu0 0.0
    %339 = vmatprep.subr.mxu0 0.0
    %340 = vmatpush1.msra.mxu0 0.0
    %341 = vmatprep.subr.mxu0 0.0
    %342 = vmatpush1.msra.mxu0 0.0
    %343 = vmatprep.subr.mxu0 0.0
    %344 = vmatpush1.msra.mxu0 0.0
    %345 = vmatprep.subr.mxu0 0.0
    %346 = vmatpush1.msra.mxu0 0.0
    %347 = vmatprep.subr.mxu0 0.0
    %348 = vmatpush1.msra.mxu0 0.0
    %349 = vmatprep.subr.mxu0 0.0
    %350 = vmatpush1.msra.mxu0 0.0
    %351 = vmatprep.subr.mxu0 0.0
    %352 = vmatpush1.msra.mxu0 0.0
    %353 = vmatprep.subr.mxu0 0.0
    %354 = vmatpush1.msra.mxu0 0.0
    %355 = vmatprep.mubr.f32.mxu0 0.0
    %356 = vmatmul.mubr.f32.gmra.mrb[0].mxu0 %v289
    %v357 = vpop.f32.mrb[0].mxu0
    %v358 = vadd.f32 0.0, %v357
    %v359 = vpop.f32.mrb[0].mxu0
    %360 = vdwg.mxu0
    %v361 = vadd.f32 %v242, %v358
    %v362 = vxor.u32 %v361, 2147483648
    %v363 = vmul.f32 %v362, 1.442695
    %v364 = vpow.pop %v363
    %v365 = vadd.f32 %v364, 1.0
    %v366 = vrcp.pop %v365
    %v367 = vmul.f32 1.0, %v366
    %v368 = vadd.f32 %v358, %v285
    %v371 = vunpack.c.l.s4 1983009808
    %v372 = vunpack.c.0.s8 %v371
    %v373 = vlaneseq
    %v374 = vshrl.u32 %v373, 7
    %v375 = vsub.s32 %v372, %v374
    %v376 = vrot.slane %v368, %v375
    %377 = vrot.lane.b32.xlu0 %v376, 64
    %v378 = vpop.permute.xlu0 %377
    %v380 = vmul.f32 %v367, %v378
    %382 = vrot.lane.b32.xlu0 %v380, 64
    %v383 = vpop.permute.xlu0 %382
    %v385 = vadd.f32 %v242, %v383
    %v386 = vtanh.pop %v385
    %v387 = vsub.f32 1.0, %v367
    %389 = vrot.lane.b32.xlu0 %v386, 96
    %v390 = vpop.permute.xlu0 %389
    %v392 = vmul.f32 %v387, %v390
    %v393 = vmul.f32 %v367, 0.0
    %v394 = vadd.f32 %v392, %v393
    %v397 = vunpack.c.l.s4 1983009808
    %v398 = vunpack.c.0.s8 %v397
    %v399 = vlaneseq
    %v400 = vshrl.u32 %v399, 7
    %v401 = vsub.s32 %v398, %v400
    %v402 = vrot.slane %v394, %v401
    %403 = vrot.lane.b32.xlu0 %v402, 96
    %v404 = vpop.permute.xlu0 %403
    %v405 = vsel %vm287, %v404, 0
    %407 = vmatprep.subr.mxu0 0.0
    %408 = vmatpush1.msra.mxu0 %v277
    %409 = vmatprep.subr.mxu0 0.0
    %410 = vmatpush1.msra.mxu0 %v278
    %411 = vmatprep.subr.mxu0 0.0
    %412 = vmatpush1.msra.mxu0 %v279
    %413 = vmatprep.subr.mxu0 0.0
    %414 = vmatpush1.msra.mxu0 %v280
    %415 = vmatprep.subr.mxu0 0.0
    %416 = vmatpush1.msra.mxu0 0.0
    %417 = vmatprep.subr.mxu0 0.0
    %418 = vmatpush1.msra.mxu0 0.0
    %419 = vmatprep.subr.mxu0 0.0
    %420 = vmatpush1.msra.mxu0 0.0
    %421 = vmatprep.subr.mxu0 0.0
    %422 = vmatpush1.msra.mxu0 0.0
    %423 = vmatprep.subr.mxu0 0.0
    %424 = vmatpush1.msra.mxu0 0.0
    %425 = vmatprep.subr.mxu0 0.0
    %426 = vmatpush1.msra.mxu0 0.0
    %427 = vmatprep.subr.mxu0 0.0
    %428 = vmatpush1.msra.mxu0 0.0
    %429 = vmatprep.subr.mxu0 0.0
    %430 = vmatpush1.msra.mxu0 0.0
    %431 = vmatprep.subr.mxu0 0.0
    %432 = vmatpush1.msra.mxu0 0.0
    %433 = vmatprep.subr.mxu0 0.0
    %434 = vmatpush1.msra.mxu0 0.0
    %435 = vmatprep.subr.mxu0 0.0
    %436 = vmatpush1.msra.mxu0 0.0
    %437 = vmatprep.subr.mxu0 0.0
    %438 = vmatpush1.msra.mxu0 0.0
    %439 = vmatprep.subr.mxu0 0.0
    %440 = vmatpush1.msra.mxu0 0.0
    %441 = vmatprep.subr.mxu0 0.0
    %442 = vmatpush1.msra.mxu0 0.0
    %443 = vmatprep.subr.mxu0 0.0
    %444 = vmatpush1.msra.mxu0 0.0
    %445 = vmatprep.subr.mxu0 0.0
    %446 = vmatpush1.msra.mxu0 0.0
    %447 = vmatprep.subr.mxu0 0.0
    %448 = vmatpush1.msra.mxu0 0.0
    %449 = vmatprep.subr.mxu0 0.0
    %450 = vmatpush1.msra.mxu0 0.0
    %451 = vmatprep.subr.mxu0 0.0
    %452 = vmatpush1.msra.mxu0 0.0
    %453 = vmatprep.subr.mxu0 0.0
    %454 = vmatpush1.msra.mxu0 0.0
    %455 = vmatprep.subr.mxu0 0.0
    %456 = vmatpush1.msra.mxu0 0.0
    %457 = vmatprep.subr.mxu0 0.0
    %458 = vmatpush1.msra.mxu0 0.0
    %459 = vmatprep.subr.mxu0 0.0
    %460 = vmatpush1.msra.mxu0 0.0
    %461 = vmatprep.subr.mxu0 0.0
    %462 = vmatpush1.msra.mxu0 0.0
    %463 = vmatprep.subr.mxu0 0.0
    %464 = vmatpush1.msra.mxu0 0.0
    %465 = vmatprep.subr.mxu0 0.0
    %466 = vmatpush1.msra.mxu0 0.0
    %467 = vmatprep.subr.mxu0 0.0
    %468 = vmatpush1.msra.mxu0 0.0
    %469 = vmatprep.subr.mxu0 0.0
    %470 = vmatpush1.msra.mxu0 0.0
    %471 = vmatprep.mubr.f32.mxu0 0.0
    %472 = vmatmul.mubr.f32.gmra.mrb[0].mxu0 %v405
    %v473 = vpop.f32.mrb[0].mxu0
    %v474 = vadd.f32 0.0, %v473
    %v475 = vpop.f32.mrb[0].mxu0
    %476 = vdwg.mxu0
    %v477 = vadd.f32 %v250, %v474
    %v478 = vxor.u32 %v477, 2147483648
    %v479 = vmul.f32 %v478, 1.442695
    %v480 = vpow.pop %v479
    %v481 = vadd.f32 %v480, 1.0
    %v482 = vrcp.pop %v481
    %v483 = vmul.f32 1.0, %v482
    %v484 = vadd.f32 %v474, %v285
    %v487 = vunpack.c.l.s4 1983009808
    %v488 = vunpack.c.0.s8 %v487
    %v489 = vlaneseq
    %v490 = vshrl.u32 %v489, 7
    %v491 = vsub.s32 %v488, %v490
    %v492 = vrot.slane %v484, %v491
    %493 = vrot.lane.b32.xlu0 %v492, 64
    %v494 = vpop.permute.xlu0 %493
    %v496 = vmul.f32 %v483, %v494
    %498 = vrot.lane.b32.xlu0 %v496, 64
    %v499 = vpop.permute.xlu0 %498
    %v501 = vadd.f32 %v250, %v499
    %v502 = vtanh.pop %v501
    %v503 = vsub.f32 1.0, %v483
    %505 = vrot.lane.b32.xlu0 %v502, 96
    %v506 = vpop.permute.xlu0 %505
    %v508 = vmul.f32 %v503, %v506
    %v509 = vmul.f32 %v483, %v394
    %v510 = vadd.f32 %v508, %v509
    %v513 = vunpack.c.l.s4 1983009808
    %v514 = vunpack.c.0.s8 %v513
    %v515 = vlaneseq
    %v516 = vshrl.u32 %v515, 7
    %v517 = vsub.s32 %v514, %v516
    %v518 = vrot.slane %v510, %v517
    %519 = vrot.lane.b32.xlu0 %v518, 96
    %v520 = vpop.permute.xlu0 %519
    %v521 = vsel %vm287, %v520, 0
    %523 = vmatprep.subr.mxu0 0.0
    %524 = vmatpush1.msra.mxu0 %v277
    %525 = vmatprep.subr.mxu0 0.0
    %526 = vmatpush1.msra.mxu0 %v278
    %527 = vmatprep.subr.mxu0 0.0
    %528 = vmatpush1.msra.mxu0 %v279
    %529 = vmatprep.subr.mxu0 0.0
    %530 = vmatpush1.msra.mxu0 %v280
    %531 = vmatprep.subr.mxu0 0.0
    %532 = vmatpush1.msra.mxu0 0.0
    %533 = vmatprep.subr.mxu0 0.0
    %534 = vmatpush1.msra.mxu0 0.0
    %535 = vmatprep.subr.mxu0 0.0
    %536 = vmatpush1.msra.mxu0 0.0
    %537 = vmatprep.subr.mxu0 0.0
    %538 = vmatpush1.msra.mxu0 0.0
    %539 = vmatprep.subr.mxu0 0.0
    %540 = vmatpush1.msra.mxu0 0.0
    %541 = vmatprep.subr.mxu0 0.0
    %542 = vmatpush1.msra.mxu0 0.0
    %543 = vmatprep.subr.mxu0 0.0
    %544 = vmatpush1.msra.mxu0 0.0
    %545 = vmatprep.subr.mxu0 0.0
    %546 = vmatpush1.msra.mxu0 0.0
    %547 = vmatprep.subr.mxu0 0.0
    %548 = vmatpush1.msra.mxu0 0.0
    %549 = vmatprep.subr.mxu0 0.0
    %550 = vmatpush1.msra.mxu0 0.0
    %551 = vmatprep.subr.mxu0 0.0
    %552 = vmatpush1.msra.mxu0 0.0
    %553 = vmatprep.subr.mxu0 0.0
    %554 = vmatpush1.msra.mxu0 0.0
    %555 = vmatprep.subr.mxu0 0.0
    %556 = vmatpush1.msra.mxu0 0.0
    %557 = vmatprep.subr.mxu0 0.0
    %558 = vmatpush1.msra.mxu0 0.0
    %559 = vmatprep.subr.mxu0 0.0
    %560 = vmatpush1.msra.mxu0 0.0
    %561 = vmatprep.subr.mxu0 0.0
    %562 = vmatpush1.msra.mxu0 0.0
    %563 = vmatprep.subr.mxu0 0.0
    %564 = vmatpush1.msra.mxu0 0.0
    %565 = vmatprep.subr.mxu0 0.0
    %566 = vmatpush1.msra.mxu0 0.0
    %567 = vmatprep.subr.mxu0 0.0
    %568 = vmatpush1.msra.mxu0 0.0
    %569 = vmatprep.subr.mxu0 0.0
    %570 = vmatpush1.msra.mxu0 0.0
    %571 = vmatprep.subr.mxu0 0.0
    %572 = vmatpush1.msra.mxu0 0.0
    %573 = vmatprep.subr.mxu0 0.0
    %574 = vmatpush1.msra.mxu0 0.0
    %575 = vmatprep.subr.mxu0 0.0
    %576 = vmatpush1.msra.mxu0 0.0
    %577 = vmatprep.subr.mxu0 0.0
    %578 = vmatpush1.msra.mxu0 0.0
    %579 = vmatprep.subr.mxu0 0.0
    %580 = vmatpush1.msra.mxu0 0.0
    %581 = vmatprep.subr.mxu0 0.0
    %582 = vmatpush1.msra.mxu0 0.0
    %583 = vmatprep.subr.mxu0 0.0
    %584 = vmatpush1.msra.mxu0 0.0
    %585 = vmatprep.subr.mxu0 0.0
    %586 = vmatpush1.msra.mxu0 0.0
    %587 = vmatprep.mubr.f32.mxu0 0.0
    %588 = vmatmul.mubr.f32.gmra.mrb[0].mxu0 %v521
    %v589 = vpop.f32.mrb[0].mxu0
    %v590 = vadd.f32 0.0, %v589
    %v591 = vpop.f32.mrb[0].mxu0
    %592 = vdwg.mxu0
    %v593 = vadd.f32 %v249, %v590
    %v594 = vxor.u32 %v593, 2147483648
    %v595 = vmul.f32 %v594, 1.442695
    %v596 = vpow.pop %v595
    %v597 = vadd.f32 %v596, 1.0
    %v598 = vrcp.pop %v597
    %v599 = vmul.f32 1.0, %v598
    %v600 = vadd.f32 %v590, %v285
    %v603 = vunpack.c.l.s4 1983009808
    %v604 = vunpack.c.0.s8 %v603
    %v605 = vlaneseq
    %v606 = vshrl.u32 %v605, 7
    %v607 = vsub.s32 %v604, %v606
    %v608 = vrot.slane %v600, %v607
    %609 = vrot.lane.b32.xlu0 %v608, 64
    %v610 = vpop.permute.xlu0 %609
    %v612 = vmul.f32 %v599, %v610
    %614 = vrot.lane.b32.xlu0 %v612, 64
    %v615 = vpop.permute.xlu0 %614
    %v617 = vadd.f32 %v249, %v615
    %v618 = vtanh.pop %v617
    %v619 = vsub.f32 1.0, %v599
    %621 = vrot.lane.b32.xlu0 %v618, 96
    %v622 = vpop.permute.xlu0 %621
    %v624 = vmul.f32 %v619, %v622
    %v625 = vmul.f32 %v599, %v510
    %v626 = vadd.f32 %v624, %v625
    %v629 = vunpack.c.l.s4 1983009808
    %v630 = vunpack.c.0.s8 %v629
    %v631 = vlaneseq
    %v632 = vshrl.u32 %v631, 7
    %v633 = vsub.s32 %v630, %v632
    %v634 = vrot.slane %v626, %v633
    %635 = vrot.lane.b32.xlu0 %v634, 96
    %v636 = vpop.permute.xlu0 %635
    %v637 = vsel %vm287, %v636, 0
    %639 = vmatprep.subr.mxu0 0.0
    %640 = vmatpush1.msra.mxu0 %v277
    %641 = vmatprep.subr.mxu0 0.0
    %642 = vmatpush1.msra.mxu0 %v278
    %643 = vmatprep.subr.mxu0 0.0
    %644 = vmatpush1.msra.mxu0 %v279
    %645 = vmatprep.subr.mxu0 0.0
    %646 = vmatpush1.msra.mxu0 %v280
    %647 = vmatprep.subr.mxu0 0.0
    %648 = vmatpush1.msra.mxu0 0.0
    %649 = vmatprep.subr.mxu0 0.0
    %650 = vmatpush1.msra.mxu0 0.0
    %651 = vmatprep.subr.mxu0 0.0
    %652 = vmatpush1.msra.mxu0 0.0
    %653 = vmatprep.subr.mxu0 0.0
    %654 = vmatpush1.msra.mxu0 0.0
    %655 = vmatprep.subr.mxu0 0.0
    %656 = vmatpush1.msra.mxu0 0.0
    %657 = vmatprep.subr.mxu0 0.0
    %658 = vmatpush1.msra.mxu0 0.0
    %659 = vmatprep.subr.mxu0 0.0
    %660 = vmatpush1.msra.mxu0 0.0
    %661 = vmatprep.subr.mxu0 0.0
    %662 = vmatpush1.msra.mxu0 0.0
    %663 = vmatprep.subr.mxu0 0.0
    %664 = vmatpush1.msra.mxu0 0.0
    %665 = vmatprep.subr.mxu0 0.0
    %666 = vmatpush1.msra.mxu0 0.0
    %667 = vmatprep.subr.mxu0 0.0
    %668 = vmatpush1.msra.mxu0 0.0
    %669 = vmatprep.subr.mxu0 0.0
    %670 = vmatpush1.msra.mxu0 0.0
    %671 = vmatprep.subr.mxu0 0.0
    %672 = vmatpush1.msra.mxu0 0.0
    %673 = vmatprep.subr.mxu0 0.0
    %674 = vmatpush1.msra.mxu0 0.0
    %675 = vmatprep.subr.mxu0 0.0
    %676 = vmatpush1.msra.mxu0 0.0
    %677 = vmatprep.subr.mxu0 0.0
    %678 = vmatpush1.msra.mxu0 0.0
    %679 = vmatprep.subr.mxu0 0.0
    %680 = vmatpush1.msra.mxu0 0.0
    %681 = vmatprep.subr.mxu0 0.0
    %682 = vmatpush1.msra.mxu0 0.0
    %683 = vmatprep.subr.mxu0 0.0
    %684 = vmatpush1.msra.mxu0 0.0
    %685 = vmatprep.subr.mxu0 0.0
    %686 = vmatpush1.msra.mxu0 0.0
    %687 = vmatprep.subr.mxu0 0.0
    %688 = vmatpush1.msra.mxu0 0.0
    %689 = vmatprep.subr.mxu0 0.0
    %690 = vmatpush1.msra.mxu0 0.0
    %691 = vmatprep.subr.mxu0 0.0
    %692 = vmatpush1.msra.mxu0 0.0
    %693 = vmatprep.subr.mxu0 0.0
    %694 = vmatpush1.msra.mxu0 0.0
    %695 = vmatprep.subr.mxu0 0.0
    %696 = vmatpush1.msra.mxu0 0.0
    %697 = vmatprep.subr.mxu0 0.0
    %698 = vmatpush1.msra.mxu0 0.0
    %699 = vmatprep.subr.mxu0 0.0
    %700 = vmatpush1.msra.mxu0 0.0
    %701 = vmatprep.subr.mxu0 0.0
    %702 = vmatpush1.msra.mxu0 0.0
    %703 = vmatprep.mubr.f32.mxu0 0.0
    %704 = vmatmul.mubr.f32.gmra.mrb[0].mxu0 %v637
    %v705 = vpop.f32.mrb[0].mxu0
    %v706 = vadd.f32 0.0, %v705
    %v707 = vpop.f32.mrb[0].mxu0
    %708 = vdwg.mxu0
    %v709 = vadd.f32 %v251, %v706
    %v710 = vxor.u32 %v709, 2147483648
    %v711 = vmul.f32 %v710, 1.442695
    %v712 = vpow.pop %v711
    %v713 = vadd.f32 %v712, 1.0
    %v714 = vrcp.pop %v713
    %v715 = vmul.f32 1.0, %v714
    %v716 = vadd.f32 %v706, %v285
    %v719 = vunpack.c.l.s4 1983009808
    %v720 = vunpack.c.0.s8 %v719
    %v721 = vlaneseq
    %v722 = vshrl.u32 %v721, 7
    %v723 = vsub.s32 %v720, %v722
    %v724 = vrot.slane %v716, %v723
    %725 = vrot.lane.b32.xlu0 %v724, 64
    %v726 = vpop.permute.xlu0 %725
    %v728 = vmul.f32 %v715, %v726
    %730 = vrot.lane.b32.xlu0 %v728, 64
    %v731 = vpop.permute.xlu0 %730
    %v733 = vadd.f32 %v251, %v731
    %v734 = vtanh.pop %v733
    %v735 = vsub.f32 1.0, %v715
    %737 = vrot.lane.b32.xlu0 %v734, 96
    %v738 = vpop.permute.xlu0 %737
    %v740 = vmul.f32 %v735, %v738
    %v741 = vmul.f32 %v715, %v626
    %v742 = vadd.f32 %v740, %v741
    %v745 = vunpack.c.l.s4 1983009808
    %v746 = vunpack.c.0.s8 %v745
    %v747 = vlaneseq
    %v748 = vshrl.u32 %v747, 7
    %v749 = vsub.s32 %v746, %v748
    %v750 = vrot.slane %v742, %v749
    %751 = vrot.lane.b32.xlu0 %v750, 96
    %v752 = vpop.permute.xlu0 %751
    %v753 = vsel %vm287, %v752, 0
    %755 = vmatprep.subr.mxu0 0.0
    %756 = vmatpush1.msra.mxu0 %v277
    %757 = vmatprep.subr.mxu0 0.0
    %758 = vmatpush1.msra.mxu0 %v278
    %759 = vmatprep.subr.mxu0 0.0
    %760 = vmatpush1.msra.mxu0 %v279
    %761 = vmatprep.subr.mxu0 0.0
    %762 = vmatpush1.msra.mxu0 %v280
    %763 = vmatprep.subr.mxu0 0.0
    %764 = vmatpush1.msra.mxu0 0.0
    %765 = vmatprep.subr.mxu0 0.0
    %766 = vmatpush1.msra.mxu0 0.0
    %767 = vmatprep.subr.mxu0 0.0
    %768 = vmatpush1.msra.mxu0 0.0
    %769 = vmatprep.subr.mxu0 0.0
    %770 = vmatpush1.msra.mxu0 0.0
    %771 = vmatprep.subr.mxu0 0.0
    %772 = vmatpush1.msra.mxu0 0.0
    %773 = vmatprep.subr.mxu0 0.0
    %774 = vmatpush1.msra.mxu0 0.0
    %775 = vmatprep.subr.mxu0 0.0
    %776 = vmatpush1.msra.mxu0 0.0
    %777 = vmatprep.subr.mxu0 0.0
    %778 = vmatpush1.msra.mxu0 0.0
    %779 = vmatprep.subr.mxu0 0.0
    %780 = vmatpush1.msra.mxu0 0.0
    %781 = vmatprep.subr.mxu0 0.0
    %782 = vmatpush1.msra.mxu0 0.0
    %783 = vmatprep.subr.mxu0 0.0
    %784 = vmatpush1.msra.mxu0 0.0
    %785 = vmatprep.subr.mxu0 0.0
    %786 = vmatpush1.msra.mxu0 0.0
    %787 = vmatprep.subr.mxu0 0.0
    %788 = vmatpush1.msra.mxu0 0.0
    %789 = vmatprep.subr.mxu0 0.0
    %790 = vmatpush1.msra.mxu0 0.0
    %791 = vmatprep.subr.mxu0 0.0
    %792 = vmatpush1.msra.mxu0 0.0
    %793 = vmatprep.subr.mxu0 0.0
    %794 = vmatpush1.msra.mxu0 0.0
    %795 = vmatprep.subr.mxu0 0.0
    %796 = vmatpush1.msra.mxu0 0.0
    %797 = vmatprep.subr.mxu0 0.0
    %798 = vmatpush1.msra.mxu0 0.0
    %799 = vmatprep.subr.mxu0 0.0
    %800 = vmatpush1.msra.mxu0 0.0
    %801 = vmatprep.subr.mxu0 0.0
    %802 = vmatpush1.msra.mxu0 0.0
    %803 = vmatprep.subr.mxu0 0.0
    %804 = vmatpush1.msra.mxu0 0.0
    %805 = vmatprep.subr.mxu0 0.0
    %806 = vmatpush1.msra.mxu0 0.0
    %807 = vmatprep.subr.mxu0 0.0
    %808 = vmatpush1.msra.mxu0 0.0
    %809 = vmatprep.subr.mxu0 0.0
    %810 = vmatpush1.msra.mxu0 0.0
    %811 = vmatprep.subr.mxu0 0.0
    %812 = vmatpush1.msra.mxu0 0.0
    %813 = vmatprep.subr.mxu0 0.0
    %814 = vmatpush1.msra.mxu0 0.0
    %815 = vmatprep.subr.mxu0 0.0
    %816 = vmatpush1.msra.mxu0 0.0
    %817 = vmatprep.subr.mxu0 0.0
    %818 = vmatpush1.msra.mxu0 0.0
    %819 = vmatprep.mubr.f32.mxu0 0.0
    %820 = vmatmul.mubr.f32.gmra.mrb[0].mxu0 %v753
    %v821 = vpop.f32.mrb[0].mxu0
    %v822 = vadd.f32 0.0, %v821
    %v823 = vpop.f32.mrb[0].mxu0
    %824 = vdwg.mxu0
    %v825 = vadd.f32 %v259, %v822
    %v826 = vxor.u32 %v825, 2147483648
    %v827 = vmul.f32 %v826, 1.442695
    %v828 = vpow.pop %v827
    %v829 = vadd.f32 %v828, 1.0
    %v830 = vrcp.pop %v829
    %v831 = vmul.f32 1.0, %v830
    %v832 = vadd.f32 %v822, %v285
    %v835 = vunpack.c.l.s4 1983009808
    %v836 = vunpack.c.0.s8 %v835
    %v837 = vlaneseq
    %v838 = vshrl.u32 %v837, 7
    %v839 = vsub.s32 %v836, %v838
    %v840 = vrot.slane %v832, %v839
    %841 = vrot.lane.b32.xlu0 %v840, 64
    %v842 = vpop.permute.xlu0 %841
    %v844 = vmul.f32 %v831, %v842
    %846 = vrot.lane.b32.xlu0 %v844, 64
    %v847 = vpop.permute.xlu0 %846
    %v849 = vadd.f32 %v259, %v847
    %v850 = vtanh.pop %v849
    %v851 = vsub.f32 1.0, %v831
    %853 = vrot.lane.b32.xlu0 %v850, 96
    %v854 = vpop.permute.xlu0 %853
    %v856 = vmul.f32 %v851, %v854
    %v857 = vmul.f32 %v831, %v742
    %v858 = vadd.f32 %v856, %v857
    %v861 = vunpack.c.l.s4 1983009808
    %v862 = vunpack.c.0.s8 %v861
    %v863 = vlaneseq
    %v864 = vshrl.u32 %v863, 7
    %v865 = vsub.s32 %v862, %v864
    %v866 = vrot.slane %v858, %v865
    %867 = vrot.lane.b32.xlu0 %v866, 96
    %v868 = vpop.permute.xlu0 %867
    %v869 = vsel %vm287, %v868, 0
    %871 = vmatprep.subr.mxu0 0.0
    %872 = vmatpush1.msra.mxu0 %v277
    %873 = vmatprep.subr.mxu0 0.0
    %874 = vmatpush1.msra.mxu0 %v278
    %875 = vmatprep.subr.mxu0 0.0
    %876 = vmatpush1.msra.mxu0 %v279
    %877 = vmatprep.subr.mxu0 0.0
    %878 = vmatpush1.msra.mxu0 %v280
    %879 = vmatprep.subr.mxu0 0.0
    %880 = vmatpush1.msra.mxu0 0.0
    %881 = vmatprep.subr.mxu0 0.0
    %882 = vmatpush1.msra.mxu0 0.0
    %883 = vmatprep.subr.mxu0 0.0
    %884 = vmatpush1.msra.mxu0 0.0
    %885 = vmatprep.subr.mxu0 0.0
    %886 = vmatpush1.msra.mxu0 0.0
    %887 = vmatprep.subr.mxu0 0.0
    %888 = vmatpush1.msra.mxu0 0.0
    %889 = vmatprep.subr.mxu0 0.0
    %890 = vmatpush1.msra.mxu0 0.0
    %891 = vmatprep.subr.mxu0 0.0
    %892 = vmatpush1.msra.mxu0 0.0
    %893 = vmatprep.subr.mxu0 0.0
    %894 = vmatpush1.msra.mxu0 0.0
    %895 = vmatprep.subr.mxu0 0.0
    %896 = vmatpush1.msra.mxu0 0.0
    %897 = vmatprep.subr.mxu0 0.0
    %898 = vmatpush1.msra.mxu0 0.0
    %899 = vmatprep.subr.mxu0 0.0
    %900 = vmatpush1.msra.mxu0 0.0
    %901 = vmatprep.subr.mxu0 0.0
    %902 = vmatpush1.msra.mxu0 0.0
    %903 = vmatprep.subr.mxu0 0.0
    %904 = vmatpush1.msra.mxu0 0.0
    %905 = vmatprep.subr.mxu0 0.0
    %906 = vmatpush1.msra.mxu0 0.0
    %907 = vmatprep.subr.mxu0 0.0
    %908 = vmatpush1.msra.mxu0 0.0
    %909 = vmatprep.subr.mxu0 0.0
    %910 = vmatpush1.msra.mxu0 0.0
    %911 = vmatprep.subr.mxu0 0.0
    %912 = vmatpush1.msra.mxu0 0.0
    %913 = vmatprep.subr.mxu0 0.0
    %914 = vmatpush1.msra.mxu0 0.0
    %915 = vmatprep.subr.mxu0 0.0
    %916 = vmatpush1.msra.mxu0 0.0
    %917 = vmatprep.subr.mxu0 0.0
    %918 = vmatpush1.msra.mxu0 0.0
    %919 = vmatprep.subr.mxu0 0.0
    %920 = vmatpush1.msra.mxu0 0.0
    %921 = vmatprep.subr.mxu0 0.0
    %922 = vmatpush1.msra.mxu0 0.0
    %923 = vmatprep.subr.mxu0 0.0
    %924 = vmatpush1.msra.mxu0 0.0
    %925 = vmatprep.subr.mxu0 0.0
    %926 = vmatpush1.msra.mxu0 0.0
    %927 = vmatprep.subr.mxu0 0.0
    %928 = vmatpush1.msra.mxu0 0.0
    %929 = vmatprep.subr.mxu0 0.0
    %930 = vmatpush1.msra.mxu0 0.0
    %931 = vmatprep.subr.mxu0 0.0
    %932 = vmatpush1.msra.mxu0 0.0
    %933 = vmatprep.subr.mxu0 0.0
    %934 = vmatpush1.msra.mxu0 0.0
    %935 = vmatprep.mubr.f32.mxu0 0.0
    %936 = vmatmul.mubr.f32.gmra.mrb[0].mxu0 %v869
    %v937 = vpop.f32.mrb[0].mxu0
    %v938 = vadd.f32 0.0, %v937
    %v939 = vpop.f32.mrb[0].mxu0
    %940 = vdwg.mxu0
    %v941 = vadd.f32 %v267, %v938
    %v942 = vxor.u32 %v941, 2147483648
    %v943 = vmul.f32 %v942, 1.442695
    %v944 = vpow.pop %v943
    %v945 = vadd.f32 %v944, 1.0
    %v946 = vrcp.pop %v945
    %v947 = vmul.f32 1.0, %v946
    %v948 = vadd.f32 %v938, %v285
    %v951 = vunpack.c.l.s4 1983009808
    %v952 = vunpack.c.0.s8 %v951
    %v953 = vlaneseq
    %v954 = vshrl.u32 %v953, 7
    %v955 = vsub.s32 %v952, %v954
    %v956 = vrot.slane %v948, %v955
    %957 = vrot.lane.b32.xlu0 %v956, 64
    %v958 = vpop.permute.xlu0 %957
    %v960 = vmul.f32 %v947, %v958
    %962 = vrot.lane.b32.xlu0 %v960, 64
    %v963 = vpop.permute.xlu0 %962
    %v965 = vadd.f32 %v267, %v963
    %v966 = vtanh.pop %v965
    %v967 = vsub.f32 1.0, %v947
    %969 = vrot.lane.b32.xlu0 %v966, 96
    %v970 = vpop.permute.xlu0 %969
    %v972 = vmul.f32 %v967, %v970
    %v973 = vmul.f32 %v947, %v858
    %v974 = vadd.f32 %v972, %v973
    %v977 = vunpack.c.l.s4 1983009808
    %v978 = vunpack.c.0.s8 %v977
    %v979 = vlaneseq
    %v980 = vshrl.u32 %v979, 7
    %v981 = vsub.s32 %v978, %v980
    %v982 = vrot.slane %v974, %v981
    %983 = vrot.lane.b32.xlu0 %v982, 96
    %v984 = vpop.permute.xlu0 %983
    %v985 = vsel %vm287, %v984, 0
    %987 = vmatprep.subr.mxu0 0.0
    %988 = vmatpush1.msra.mxu0 %v277
    %989 = vmatprep.subr.mxu0 0.0
    %990 = vmatpush1.msra.mxu0 %v278
    %991 = vmatprep.subr.mxu0 0.0
    %992 = vmatpush1.msra.mxu0 %v279
    %993 = vmatprep.subr.mxu0 0.0
    %994 = vmatpush1.msra.mxu0 %v280
    %995 = vmatprep.subr.mxu0 0.0
    %996 = vmatpush1.msra.mxu0 0.0
    %997 = vmatprep.subr.mxu0 0.0
    %998 = vmatpush1.msra.mxu0 0.0
    %999 = vmatprep.subr.mxu0 0.0
    %1000 = vmatpush1.msra.mxu0 0.0
    %1001 = vmatprep.subr.mxu0 0.0
    %1002 = vmatpush1.msra.mxu0 0.0
    %1003 = vmatprep.subr.mxu0 0.0
    %1004 = vmatpush1.msra.mxu0 0.0
    %1005 = vmatprep.subr.mxu0 0.0
    %1006 = vmatpush1.msra.mxu0 0.0
    %1007 = vmatprep.subr.mxu0 0.0
    %1008 = vmatpush1.msra.mxu0 0.0
    %1009 = vmatprep.subr.mxu0 0.0
    %1010 = vmatpush1.msra.mxu0 0.0
    %1011 = vmatprep.subr.mxu0 0.0
    %1012 = vmatpush1.msra.mxu0 0.0
    %1013 = vmatprep.subr.mxu0 0.0
    %1014 = vmatpush1.msra.mxu0 0.0
    %1015 = vmatprep.subr.mxu0 0.0
    %1016 = vmatpush1.msra.mxu0 0.0
    %1017 = vmatprep.subr.mxu0 0.0
    %1018 = vmatpush1.msra.mxu0 0.0
    %1019 = vmatprep.subr.mxu0 0.0
    %1020 = vmatpush1.msra.mxu0 0.0
    %1021 = vmatprep.subr.mxu0 0.0
    %1022 = vmatpush1.msra.mxu0 0.0
    %1023 = vmatprep.subr.mxu0 0.0
    %1024 = vmatpush1.msra.mxu0 0.0
    %1025 = vmatprep.subr.mxu0 0.0
    %1026 = vmatpush1.msra.mxu0 0.0
    %1027 = vmatprep.subr.mxu0 0.0
    %1028 = vmatpush1.msra.mxu0 0.0
    %1029 = vmatprep.subr.mxu0 0.0
    %1030 = vmatpush1.msra.mxu0 0.0
    %1031 = vmatprep.subr.mxu0 0.0
    %1032 = vmatpush1.msra.mxu0 0.0
    %1033 = vmatprep.subr.mxu0 0.0
    %1034 = vmatpush1.msra.mxu0 0.0
    %1035 = vmatprep.subr.mxu0 0.0
    %1036 = vmatpush1.msra.mxu0 0.0
    %1037 = vmatprep.subr.mxu0 0.0
    %1038 = vmatpush1.msra.mxu0 0.0
    %1039 = vmatprep.subr.mxu0 0.0
    %1040 = vmatpush1.msra.mxu0 0.0
    %1041 = vmatprep.subr.mxu0 0.0
    %1042 = vmatpush1.msra.mxu0 0.0
    %1043 = vmatprep.subr.mxu0 0.0
    %1044 = vmatpush1.msra.mxu0 0.0
    %1045 = vmatprep.subr.mxu0 0.0
    %1046 = vmatpush1.msra.mxu0 0.0
    %1047 = vmatprep.subr.mxu0 0.0
    %1048 = vmatpush1.msra.mxu0 0.0
    %1049 = vmatprep.subr.mxu0 0.0
    %1050 = vmatpush1.msra.mxu0 0.0
    %1051 = vmatprep.mubr.f32.mxu0 0.0
    %1052 = vmatmul.mubr.f32.gmra.mrb[0].mxu0 %v985
    %v1053 = vpop.f32.mrb[0].mxu0
    %v1054 = vadd.f32 0.0, %v1053
    %v1055 = vpop.f32.mrb[0].mxu0
    %1056 = vdwg.mxu0
    %v1057 = vadd.f32 %v266, %v1054
    %v1058 = vxor.u32 %v1057, 2147483648
    %v1059 = vmul.f32 %v1058, 1.442695
    %v1060 = vpow.pop %v1059
    %v1061 = vadd.f32 %v1060, 1.0
    %v1062 = vrcp.pop %v1061
    %v1063 = vmul.f32 1.0, %v1062
    %v1064 = vadd.f32 %v1054, %v285
    %v1067 = vunpack.c.l.s4 1983009808
    %v1068 = vunpack.c.0.s8 %v1067
    %v1069 = vlaneseq
    %v1070 = vshrl.u32 %v1069, 7
    %v1071 = vsub.s32 %v1068, %v1070
    %v1072 = vrot.slane %v1064, %v1071
    %1073 = vrot.lane.b32.xlu0 %v1072, 64
    %v1074 = vpop.permute.xlu0 %1073
    %v1076 = vmul.f32 %v1063, %v1074
    %1078 = vrot.lane.b32.xlu0 %v1076, 64
    %v1079 = vpop.permute.xlu0 %1078
    %v1081 = vadd.f32 %v266, %v1079
    %v1082 = vtanh.pop %v1081
    %v1083 = vsub.f32 1.0, %v1063
    %1085 = vrot.lane.b32.xlu0 %v1082, 96
    %v1086 = vpop.permute.xlu0 %1085
    %v1088 = vmul.f32 %v1083, %v1086
    %v1089 = vmul.f32 %v1063, %v974
    %v1090 = vadd.f32 %v1088, %v1089
    %v1093 = vunpack.c.l.s4 1983009808
    %v1094 = vunpack.c.0.s8 %v1093
    %v1095 = vlaneseq
    %v1096 = vshrl.u32 %v1095, 7
    %v1097 = vsub.s32 %v1094, %v1096
    %v1098 = vrot.slane %v1090, %v1097
    %1099 = vrot.lane.b32.xlu0 %v1098, 96
    %v1100 = vpop.permute.xlu0 %1099
    %v1101 = vsel %vm287, %v1100, 0
    %1103 = vmatprep.subr.mxu0 0.0
    %1104 = vmatpush1.msra.mxu0 %v277
    %1105 = vmatprep.subr.mxu0 0.0
    %1106 = vmatpush1.msra.mxu0 %v278
    %1107 = vmatprep.subr.mxu0 0.0
    %1108 = vmatpush1.msra.mxu0 %v279
    %1109 = vmatprep.subr.mxu0 0.0
    %1110 = vmatpush1.msra.mxu0 %v280
    %1111 = vmatprep.subr.mxu0 0.0
    %1112 = vmatpush1.msra.mxu0 0.0
    %1113 = vmatprep.subr.mxu0 0.0
    %1114 = vmatpush1.msra.mxu0 0.0
    %1115 = vmatprep.subr.mxu0 0.0
    %1116 = vmatpush1.msra.mxu0 0.0
    %1117 = vmatprep.subr.mxu0 0.0
    %1118 = vmatpush1.msra.mxu0 0.0
    %1119 = vmatprep.subr.mxu0 0.0
    %1120 = vmatpush1.msra.mxu0 0.0
    %1121 = vmatprep.subr.mxu0 0.0
    %1122 = vmatpush1.msra.mxu0 0.0
    %1123 = vmatprep.subr.mxu0 0.0
    %1124 = vmatpush1.msra.mxu0 0.0
    %1125 = vmatprep.subr.mxu0 0.0
    %1126 = vmatpush1.msra.mxu0 0.0
    %1127 = vmatprep.subr.mxu0 0.0
    %1128 = vmatpush1.msra.mxu0 0.0
    %1129 = vmatprep.subr.mxu0 0.0
    %1130 = vmatpush1.msra.mxu0 0.0
    %1131 = vmatprep.subr.mxu0 0.0
    %1132 = vmatpush1.msra.mxu0 0.0
    %1133 = vmatprep.subr.mxu0 0.0
    %1134 = vmatpush1.msra.mxu0 0.0
    %1135 = vmatprep.subr.mxu0 0.0
    %1136 = vmatpush1.msra.mxu0 0.0
    %1137 = vmatprep.subr.mxu0 0.0
    %1138 = vmatpush1.msra.mxu0 0.0
    %1139 = vmatprep.subr.mxu0 0.0
    %1140 = vmatpush1.msra.mxu0 0.0
    %1141 = vmatprep.subr.mxu0 0.0
    %1142 = vmatpush1.msra.mxu0 0.0
    %1143 = vmatprep.subr.mxu0 0.0
    %1144 = vmatpush1.msra.mxu0 0.0
    %1145 = vmatprep.subr.mxu0 0.0
    %1146 = vmatpush1.msra.mxu0 0.0
    %1147 = vmatprep.subr.mxu0 0.0
    %1148 = vmatpush1.msra.mxu0 0.0
    %1149 = vmatprep.subr.mxu0 0.0
    %1150 = vmatpush1.msra.mxu0 0.0
    %1151 = vmatprep.subr.mxu0 0.0
    %1152 = vmatpush1.msra.mxu0 0.0
    %1153 = vmatprep.subr.mxu0 0.0
    %1154 = vmatpush1.msra.mxu0 0.0
    %1155 = vmatprep.subr.mxu0 0.0
    %1156 = vmatpush1.msra.mxu0 0.0
    %1157 = vmatprep.subr.mxu0 0.0
    %1158 = vmatpush1.msra.mxu0 0.0
    %1159 = vmatprep.subr.mxu0 0.0
    %1160 = vmatpush1.msra.mxu0 0.0
    %1161 = vmatprep.subr.mxu0 0.0
    %1162 = vmatpush1.msra.mxu0 0.0
    %1163 = vmatprep.subr.mxu0 0.0
    %1164 = vmatpush1.msra.mxu0 0.0
    %1165 = vmatprep.subr.mxu0 0.0
    %1166 = vmatpush1.msra.mxu0 0.0
    %1167 = vmatprep.mubr.f32.mxu0 0.0
    %1168 = vmatmul.mubr.f32.gmra.mrb[0].mxu0 %v1101
    %v1169 = vpop.f32.mrb[0].mxu0
    %v1170 = vadd.f32 0.0, %v1169
    %v1171 = vpop.f32.mrb[0].mxu0
    %1172 = vdwg.mxu0
    %v1173 = vadd.f32 %v268, %v1170
    %v1174 = vxor.u32 %v1173, 2147483648
    %v1175 = vmul.f32 %v1174, 1.442695
    %v1176 = vpow.pop %v1175
    %v1177 = vadd.f32 %v1176, 1.0
    %v1178 = vrcp.pop %v1177
    %v1179 = vmul.f32 1.0, %v1178
    %v1180 = vadd.f32 %v1170, %v285
    %v1183 = vunpack.c.l.s4 1983009808
    %v1184 = vunpack.c.0.s8 %v1183
    %v1185 = vlaneseq
    %v1186 = vshrl.u32 %v1185, 7
    %v1187 = vsub.s32 %v1184, %v1186
    %v1188 = vrot.slane %v1180, %v1187
    %1189 = vrot.lane.b32.xlu0 %v1188, 64
    %v1190 = vpop.permute.xlu0 %1189
    %v1192 = vmul.f32 %v1179, %v1190
    %1194 = vrot.lane.b32.xlu0 %v1192, 64
    %v1195 = vpop.permute.xlu0 %1194
    %v1197 = vadd.f32 %v268, %v1195
    %v1198 = vtanh.pop %v1197
    %v1199 = vsub.f32 1.0, %v1179
    %1201 = vrot.lane.b32.xlu0 %v1198, 96
    %v1202 = vpop.permute.xlu0 %1201
    %v1204 = vmul.f32 %v1199, %v1202
    %v1205 = vmul.f32 %v1179, %v1090
    %v1206 = vadd.f32 %v1204, %v1205
    %v1207 = vld [vmem:[%s5] sm:$0xff]
    %v1208 = vld [vmem:[%s5 + $0x8] sm:$0xff]
    %v1209 = vld [vmem:[%s5 + $0x10] sm:$0xff]
    %v1210 = vld [vmem:[%s5 + $0x18] sm:$0xff]
    %v1211 = vld [vmem:[%s6] sm:$0x1]
    %v1213 = vlaneseq
    %v1214 = vshrl.u32 %v1213, 7
    %v1215 = vsub.s32 0, %v1214
    %v1216 = vrot.slane %v1211, %v1215
    %v1219 = vcombine.low %v394, %v510
    %v1220 = vcombine.low %v626, %v742
    %v1222 = vunpack.c.l.s4 1983009808
    %v1223 = vunpack.c.0.s8 %v1222
    %v1224 = vlaneseq
    %v1225 = vshrl.u32 %v1224, 7
    %v1226 = vsub.s32 %v1223, %v1225
    %v1227 = vrot.slane %v1219, %v1226
    %v1229 = vunpack.c.l.s4 1983009808
    %v1230 = vunpack.c.0.s8 %v1229
    %v1231 = vlaneseq
    %v1232 = vshrl.u32 %v1231, 7
    %v1233 = vsub.s32 %v1230, %v1232
    %v1234 = vrot.slane %v1220, %v1233
    %v1235 = vcombine.low %v1227, %v1234
    %v1236 = vcombine.low %v858, %v974
    %v1237 = vcombine.low %v1090, %v1206
    %v1239 = vunpack.c.l.s4 1983009808
    %v1240 = vunpack.c.0.s8 %v1239
    %v1241 = vlaneseq
    %v1242 = vshrl.u32 %v1241, 7
    %v1243 = vsub.s32 %v1240, %v1242
    %v1244 = vrot.slane %v1236, %v1243
    %v1246 = vunpack.c.l.s4 1983009808
    %v1247 = vunpack.c.0.s8 %v1246
    %v1248 = vlaneseq
    %v1249 = vshrl.u32 %v1248, 7
    %v1250 = vsub.s32 %v1247, %v1249
    %v1251 = vrot.slane %v1237, %v1250
    %v1252 = vcombine.low %v1244, %v1251
    %1253 = vrot.lane.b32.xlu0 %v1235, 96
    %v1254 = vpop.permute.xlu0 %1253
    %1255 = vrot.lane.b32.xlu0 %v1252, 96
    %v1256 = vpop.permute.xlu0 %1255
    %v1257 = vsel %vm287, %v1254, 0
    %v1259 = vsel %vm287, %v1256, 0
    %1261 = vmatprep.subr.mxu0 0.0
    %1262 = vmatpush1.msra.mxu0 %v1207
    %1263 = vmatprep.subr.mxu0 0.0
    %1264 = vmatpush1.msra.mxu0 %v1208
    %1265 = vmatprep.subr.mxu0 0.0
    %1266 = vmatpush1.msra.mxu0 %v1209
    %1267 = vmatprep.subr.mxu0 0.0
    %1268 = vmatpush1.msra.mxu0 %v1210
    %1269 = vmatprep.subr.mxu0 0.0
    %1270 = vmatpush1.msra.mxu0 0.0
    %1271 = vmatprep.subr.mxu0 0.0
    %1272 = vmatpush1.msra.mxu0 0.0
    %1273 = vmatprep.subr.mxu0 0.0
    %1274 = vmatpush1.msra.mxu0 0.0
    %1275 = vmatprep.subr.mxu0 0.0
    %1276 = vmatpush1.msra.mxu0 0.0
    %1277 = vmatprep.subr.mxu0 0.0
    %1278 = vmatpush1.msra.mxu0 0.0
    %1279 = vmatprep.subr.mxu0 0.0
    %1280 = vmatpush1.msra.mxu0 0.0
    %1281 = vmatprep.subr.mxu0 0.0
    %1282 = vmatpush1.msra.mxu0 0.0
    %1283 = vmatprep.subr.mxu0 0.0
    %1284 = vmatpush1.msra.mxu0 0.0
    %1285 = vmatprep.subr.mxu0 0.0
    %1286 = vmatpush1.msra.mxu0 0.0
    %1287 = vmatprep.subr.mxu0 0.0
    %1288 = vmatpush1.msra.mxu0 0.0
    %1289 = vmatprep.subr.mxu0 0.0
    %1290 = vmatpush1.msra.mxu0 0.0
    %1291 = vmatprep.subr.mxu0 0.0
    %1292 = vmatpush1.msra.mxu0 0.0
    %1293 = vmatprep.subr.mxu0 0.0
    %1294 = vmatpush1.msra.mxu0 0.0
    %1295 = vmatprep.subr.mxu0 0.0
    %1296 = vmatpush1.msra.mxu0 0.0
    %1297 = vmatprep.subr.mxu0 0.0
    %1298 = vmatpush1.msra.mxu0 0.0
    %1299 = vmatprep.subr.mxu0 0.0
    %1300 = vmatpush1.msra.mxu0 0.0
    %1301 = vmatprep.subr.mxu0 0.0
    %1302 = vmatpush1.msra.mxu0 0.0
    %1303 = vmatprep.subr.mxu0 0.0
    %1304 = vmatpush1.msra.mxu0 0.0
    %1305 = vmatprep.subr.mxu0 0.0
    %1306 = vmatpush1.msra.mxu0 0.0
    %1307 = vmatprep.subr.mxu0 0.0
    %1308 = vmatpush1.msra.mxu0 0.0
    %1309 = vmatprep.subr.mxu0 0.0
    %1310 = vmatpush1.msra.mxu0 0.0
    %1311 = vmatprep.subr.mxu0 0.0
    %1312 = vmatpush1.msra.mxu0 0.0
    %1313 = vmatprep.subr.mxu0 0.0
    %1314 = vmatpush1.msra.mxu0 0.0
    %1315 = vmatprep.subr.mxu0 0.0
    %1316 = vmatpush1.msra.mxu0 0.0
    %1317 = vmatprep.subr.mxu0 0.0
    %1318 = vmatpush1.msra.mxu0 0.0
    %1319 = vmatprep.subr.mxu0 0.0
    %1320 = vmatpush1.msra.mxu0 0.0
    %1321 = vmatprep.subr.mxu0 0.0
    %1322 = vmatpush1.msra.mxu0 0.0
    %1323 = vmatprep.subr.mxu0 0.0
    %1324 = vmatpush1.msra.mxu0 0.0
    %1325 = vmatprep.mubr.f32.mxu0 0.0
    %1326 = vmatmul.mubr.f32.gmra.mrb[0].mxu0 %v1257
    %v1327 = vpop.f32.mrb[0].mxu0
    %v1328 = vadd.f32 %v1216, %v1327
    %v1329 = vpop.f32.mrb[0].mxu0
    %1330 = vmatprep.mubr.f32.mxu0 0.0
    %1331 = vmatmul.mubr.f32.gmra.mrb[0].mxu0 %v1259
    %v1332 = vpop.f32.mrb[0].mxu0
    %v1333 = vadd.f32 %v1216, %v1332
    %v1334 = vpop.f32.mrb[0].mxu0
    %1335 = vdwg.mxu0
    %v1336 = vmax.f32 %v1328, 0.0
    %v1337 = vmax.f32 %v1333, 0.0
    %v1340 = vcombine.high %v1336, %v1336
    %v1342 = vunpack.c.l.s4 1983009808
    %v1343 = vunpack.c.0.s8 %v1342
    %v1344 = vlaneseq
    %v1345 = vshrl.u32 %v1344, 7
    %v1346 = vsub.s32 %v1343, %v1345
    %v1347 = vrot.slane %v1336, %v1346
    %v1349 = vunpack.c.l.s4 1983009808
    %v1350 = vunpack.c.0.s8 %v1349
    %v1351 = vlaneseq
    %v1352 = vshrl.u32 %v1351, 7
    %v1353 = vsub.s32 %v1350, %v1352
    %v1354 = vrot.slane %v1340, %v1353
    %v1355 = vcombine.high %v1347, %v1347
    %v1356 = vcombine.high %v1354, %v1354
    %v1357 = vcombine.high %v1337, %v1337
    %v1359 = vunpack.c.l.s4 1983009808
    %v1360 = vunpack.c.0.s8 %v1359
    %v1361 = vlaneseq
    %v1362 = vshrl.u32 %v1361, 7
    %v1363 = vsub.s32 %v1360, %v1362
    %v1364 = vrot.slane %v1337, %v1363
    %v1366 = vunpack.c.l.s4 1983009808
    %v1367 = vunpack.c.0.s8 %v1366
    %v1368 = vlaneseq
    %v1369 = vshrl.u32 %v1368, 7
    %v1370 = vsub.s32 %v1367, %v1369
    %v1371 = vrot.slane %v1357, %v1370
    %v1372 = vcombine.high %v1364, %v1364
    %v1373 = vcombine.high %v1371, %v1371
    %v1382 = vcombine.low %v1347, %v1355
    %v1384 = vunpack.c.l.s4 1934713408
    %v1385 = vunpack.c.0.s8 %v1384
    %v1386 = vlaneseq
    %v1387 = vshrl.u32 %v1386, 7
    %v1388 = vsub.s32 %v1385, %v1387
    %v1389 = vrot.slane %v1382, %v1388
    %v1390 = vcombine.high %v1389, 0.0
    %v1391 = vcombine.low %v1354, %v1356
    %v1393 = vunpack.c.l.s4 1934713408
    %v1394 = vunpack.c.0.s8 %v1393
    %v1395 = vlaneseq
    %v1396 = vshrl.u32 %v1395, 7
    %v1397 = vsub.s32 %v1394, %v1396
    %v1398 = vrot.slane %v1391, %v1397
    %v1399 = vcombine.high %v1398, 0.0
    %v1400 = vcombine.low %v1364, %v1372
    %v1402 = vunpack.c.l.s4 1934713408
    %v1403 = vunpack.c.0.s8 %v1402
    %v1404 = vlaneseq
    %v1405 = vshrl.u32 %v1404, 7
    %v1406 = vsub.s32 %v1403, %v1405
    %v1407 = vrot.slane %v1400, %v1406
    %v1408 = vcombine.high %v1407, 0.0
    %v1409 = vcombine.low %v1371, %v1373
    %v1411 = vunpack.c.l.s4 1934713408
    %v1412 = vunpack.c.0.s8 %v1411
    %v1413 = vlaneseq
    %v1414 = vshrl.u32 %v1413, 7
    %v1415 = vsub.s32 %v1412, %v1414
    %v1416 = vrot.slane %v1409, %v1415
    %v1417 = vcombine.high %v1416, 0.0
    %v1426 = vcombine.low %v1389, %v1398
    %v1427 = vcombine.low %v1407, %v1416
    %v1429 = vunpack.c.l.s4 1983009808
    %v1430 = vunpack.c.0.s8 %v1429
    %v1431 = vlaneseq
    %v1432 = vshrl.u32 %v1431, 7
    %v1433 = vsub.s32 %v1430, %v1432
    %v1434 = vrot.slane %v1426, %v1433
    %v1436 = vunpack.c.l.s4 1983009808
    %v1437 = vunpack.c.0.s8 %v1436
    %v1438 = vlaneseq
    %v1439 = vshrl.u32 %v1438, 7
    %v1440 = vsub.s32 %v1437, %v1439
    %v1441 = vrot.slane %v1427, %v1440
    %v1442 = vcombine.low %v1434, %v1441
    %v1443 = vcombine.low %v1390, %v1399
    %v1444 = vcombine.low %v1408, %v1417
    %v1446 = vunpack.c.l.s4 1983009808
    %v1447 = vunpack.c.0.s8 %v1446
    %v1448 = vlaneseq
    %v1449 = vshrl.u32 %v1448, 7
    %v1450 = vsub.s32 %v1447, %v1449
    %v1451 = vrot.slane %v1443, %v1450
    %v1453 = vunpack.c.l.s4 1983009808
    %v1454 = vunpack.c.0.s8 %v1453
    %v1455 = vlaneseq
    %v1456 = vshrl.u32 %v1455, 7
    %v1457 = vsub.s32 %v1454, %v1456
    %v1458 = vrot.slane %v1444, %v1457
    %v1459 = vcombine.low %v1451, %v1458
    %vm1462 = vcmask 130048
    %1463 = vst.msk [vmem:[#allocation2] sm:$0xff] %vm1462, %v1442
    %1464 = vst.msk [vmem:[#allocation2 + $0x8] sm:$0xff] %vm1462, %v1459
    // Predicated region
    $region30: #{tpu_custom_call.1} parent=1 // pred_check
      _
    $region31: #{tpu_custom_call.1} parent=1 // pred_check_branch
      %1466 = sbr.rel (0) target = $region33
    $region32: #{tpu_custom_call.1} parent=1 // pred_region
      %s1468 = ssub.s32 256, 256
      %1469 = vsyncadd [#allocation3], %s1468
      %s1470 = sshll.u32 [#allocation2], 4
      %s1471 = int_to_ptr.vmem [resolvable:$true] %s1470
      %1476 = dma.vmem_to_hbm [thread:$0]  %s1471, 256, %s7, [#allocation3], 128, 128, 8
    $region33: #{tpu_custom_call.1} parent=1 // pred_fallthru
      _
    // Predicated region
    $region34: #{tpu_custom_call.1} parent=1 // pred_check
      _
    $region35: #{tpu_custom_call.1} parent=1 // pred_check_branch
      %1478 = sbr.rel (0) target = $region37
    $region36: #{tpu_custom_call.1} parent=1 // pred_region
      %1479 = dma.done [#allocation3], 256
    $region37: #{tpu_custom_call.1} parent=1 // pred_fallthru
      _
    %1480 = vsyncpa [#allocation3], 1

</llo_original>
